<compile_context>
chip_gen: v7x
topology: tpu7x:2x2x1
jax: 0.10.0
libtpu: 0.0.40
codegen_flags: <defaults>
</compile_context>

<pallas_src>
import math
import functools

import jax
import jax.numpy as jnp
from jax import lax
from jax.experimental import pallas as pl
from jax.experimental.pallas import tpu as pltpu


def transformer_block_kernel(
    x_ref, bias_ref, n1_ref, wqkv_ref, wp_ref, pb_ref, n2_ref, w12_ref, w3_ref,
    o_ref, *, num_heads, head_dim, hidden_dim, eps,
):
    _, S, E = x_ref.shape
    NH, HD, HFF = num_heads, head_dim, hidden_dim

    x = x_ref[0]                                               # (S, E) f32

    # ---------------- RMSNorm 1 (f32, VPU) -------------------------------------
    h = x * lax.rsqrt(jnp.mean(x * x, axis=-1, keepdims=True) + eps) * n1_ref[0]

    # ---------------- fused QKV projection: ONE lane-dense MXU matmul ----------
    # Wqkv columns: [q(head,dim) | k(head,dim) | v(head,dim)].  RoPE (head-indexed,
    # position-independent) and the 1/sqrt(HD) scale are already folded into the
    # q/k columns by the wrapper, so no elementwise RoPE work is needed here.
    qkv = jnp.dot(h.astype(jnp.bfloat16), wqkv_ref[...],
                  preferred_element_type=jnp.float32)          # (S, 3E) f32
    qkvb = qkv.astype(jnp.bfloat16)

    # Split into per-head (NH, S, HD) operands for the batched attention matmuls.
    # Slice offsets are multiples of HD / E (tile-aligned whenever HD % 128 == 0);
    # this slice+stack is the one unavoidable [row, head*dim] -> [head, row, dim]
    # reorganisation.
    def split_heads(slab):                                     # (S, E) -> (NH, S, HD)
        return jnp.stack([slab[:, hh * HD:(hh + 1) * HD] for hh in range(NH)], axis=0)

    q = split_heads(qkvb[:, 0 * E:1 * E])
    k = split_heads(qkvb[:, 1 * E:2 * E])
    v = split_heads(qkvb[:, 2 * E:3 * E])

    # ---------------- causal attention, head-batched, f32 scores ---------------
    # TODO(synk): for real sequence lengths, extend the grid over query tiles and KV
    # blocks (flash-style online softmax) instead of holding (NH,S,S) scores in VMEM.
    s_ = jnp.einsum('hqd,hkd->hqk', q, k,
                    preferred_element_type=jnp.float32)        # (NH, S, S)
    s_ = s_ + bias_ref[...][None]        # additive causal bias (0 / -1e30, f32-safe)
    m = jnp.max(s_, axis=-1, keepdims=True)
    p = jnp.exp(s_ - m)
    p = p * pl.reciprocal(jnp.sum(p, axis=-1, keepdims=True), approx=True)   # EUP
    ctx = jnp.einsum('hqk,hkd->hqd', p.astype(jnp.bfloat16), v,
                     preferred_element_type=jnp.float32)       # (NH, S, HD) f32

    # ---------------- output projection: single (S,E)@(E,E) matmul -------------
    # Concatenate heads back to [head, dim] column order; the reduction over heads
    # happens inside the contraction (K = NH*HD = E).
    ctx_cat = jnp.concatenate([ctx[hh] for hh in range(NH)], axis=-1)        # (S, E)
    attn = jnp.dot(ctx_cat.astype(jnp.bfloat16), wp_ref[...],
                   preferred_element_type=jnp.float32) + pb_ref[0]
    y = x + attn

    # ---------------- RMSNorm 2 + FeedForward (module quirk: fc2(normed x)) ----
    h2 = y * lax.rsqrt(jnp.mean(y * y, axis=-1, keepdims=True) + eps) * n2_ref[0]
    a12 = jnp.dot(h2.astype(jnp.bfloat16), w12_ref[...],
                  preferred_element_type=jnp.float32)          # (S, HFF + E)
    a1 = a12[:, 0:HFF]               # fc1(h2)
    a2 = a12[:, HFF:HFF + E]         # fc2(h2)   (NOT fc2(fc1(h2)) -- module quirk)
    g = jax.nn.silu(a1) * a2
    ffn = jnp.dot(g.astype(jnp.bfloat16), w3_ref[...],
                  preferred_element_type=jnp.float32)          # (S, E)

    o_ref[...] = (y + ffn).reshape(1, S, E)


def transformer_block(x, params, *, num_heads, head_dim, hidden_dim, eps):
    B, S, E = x.shape
    kern = functools.partial(transformer_block_kernel, num_heads=num_heads,
                             head_dim=head_dim, hidden_dim=hidden_dim, eps=eps)

    # Precomputed causal additive bias (keeps iota/compare/select off the in-kernel
    # VPU).  Large finite negative instead of -inf: scores stay f32 -> no inf-inf NaN.
    tri = jnp.tril(jnp.ones((S, S), dtype=bool))
    bias = jnp.where(tri, 0.0, -1e30).astype(jnp.float32)

    args = (x, bias, params['n1'], params['wqkv'], params['wp'], params['projb'],
            params['n2'], params['w12'], params['w3'])

    def invariant(a):
        # Grid-invariant block: fetched into VMEM once, reused for every grid step.
        return pl.BlockSpec(a.shape, lambda b: (0,) * a.ndim)

    in_specs = ([pl.BlockSpec((1, S, E), lambda b: (b, 0, 0))]
                + [invariant(a) for a in args[1:]])

    return pl.pallas_call(
        kern,
        out_shape=jax.ShapeDtypeStruct((B, S, E), jnp.float32),
        grid=(B,),
        in_specs=in_specs,
        out_specs=pl.BlockSpec((1, S, E), lambda b: (b, 0, 0)),
        compiler_params=pltpu.CompilerParams(
            dimension_semantics=("parallel",),        # shard batch across TCs (v7x)
            vmem_limit_bytes=32 * 1024 * 1024),       # explicit VMEM budget
    )(*args)


def reference(x, params, *, num_heads, head_dim, eps, freqs_cos, freqs_sin):
    """Plain-JAX f32 mirror of the PyTorch forward pass (including its quirks)."""
    B, S, E = x.shape

    def rmsnorm(t, w):
        return t * lax.rsqrt(jnp.mean(t * t, axis=-1, keepdims=True) + eps) * w

    h = rmsnorm(x, params['n1'][0])
    qkv = h @ params['wqkv_t']
    qkv = qkv.reshape(B, S, 3, num_heads, head_dim).transpose(2, 0, 3, 1, 4)
    q, k, v = qkv[0], qkv[1], qkv[2]  # (B, H, S, hd)

    def rope(t):
        tr = t.reshape(B, num_heads, S, head_dim // 2, 2)
        te, to = tr[..., 0], tr[..., 1]
        c = freqs_cos[None, :, None, :]  # broadcast over the HEAD axis (module quirk)
        s = freqs_sin[None, :, None, :]
        re = te * c - to * s
        im = te * s + to * c
        return jnp.stack([re, im], axis=-1).reshape(B, num_heads, S, head_dim)

    q, k = rope(q), rope(k)
    scale = 1.0 / math.sqrt(head_dim)
    scores = jnp.einsum('bhqd,bhkd->bhqk', q, k) * scale
    mask = jnp.tril(jnp.ones((S, S), bool))
    scores = jnp.where(mask, scores, -jnp.inf)
    p = jax.nn.softmax(scores, axis=-1)
    out = jnp.einsum('bhqk,bhkd->bhqd', p, v)
    ctx = out.transpose(0, 2, 1, 3).reshape(B, S, E)
    y = x + (ctx @ params['projw_t'] + params['projb'][0])

    h2 = rmsnorm(y, params['n2'][0])
    a1 = h2 @ params['w1_t']
    a2 = h2 @ params['w2_t']
    g = jax.nn.silu(a1) * a2
    return y + g @ params['w3_t']


if __name__ == "__main__":
    # Small shapes consistent with the module's constraints.
    B, S = 2, 8
    E = 32                 # emb_dim
    NH = 4                 # num_heads
    HD = E // NH           # head_dim = 8
    CL = NH                # context_length == num_heads (module RoPE broadcast quirk)
    HFF = E                # hidden_dim == emb_dim (module FeedForward quirk)
    eps = float(jnp.finfo(jnp.float32).eps)  # nn.RMSNorm default eps

    key = jax.random.PRNGKey(0)
    ks = jax.random.split(key, 9)
    sw = 0.05
    fparams = {
        'n1': jnp.ones((1, E), jnp.float32) + 0.1 * jax.random.normal(ks[0], (1, E), jnp.float32),
        'n2': jnp.ones((1, E), jnp.float32) + 0.1 * jax.random.normal(ks[1], (1, E), jnp.float32),
        'wqkv_t': sw * jax.random.normal(ks[2], (E, 3 * E), jnp.float32),
        'projw_t': sw * jax.random.normal(ks[3], (E, E), jnp.float32),
        'projb': sw * jax.random.normal(ks[4], (1, E), jnp.float32),
        'w1_t': sw * jax.random.normal(ks[5], (E, HFF), jnp.float32),
        'w2_t': sw * jax.random.normal(ks[6], (HFF, E), jnp.float32),
        'w3_t': sw * jax.random.normal(ks[7], (HFF, E), jnp.float32),
    }

    # pre_compute_freq: theta_j = 10000^{-2j/hd}; angles = outer(m, theta).
    # The module's apply_rope ends up indexing m by the HEAD index.
    j = jnp.arange(HD // 2, dtype=jnp.float32)
    inv_freq = 1.0 / (10000.0 ** (2.0 * j / HD))
    m = jnp.arange(CL, dtype=jnp.float32)
    ang = jnp.outer(m, inv_freq)                      # (NH, HD//2)
    fcos, fsin = jnp.cos(ang), jnp.sin(ang)

    # ---- kernel-side parameter layouts (bf16 fused lane-dense matmul weights) ----
    # Fold RoPE into the Q/K columns.  Because the rotation angle depends only on the
    # head index (module quirk), rotating the per-head output columns by the fixed
    # per-head 2x2 rotations is exactly equivalent to applying RoPE after the
    # projection.  The 1/sqrt(HD) softmax scale is folded into the Q columns.
    def rope_fold(w_cols):                 # (E, E) columns ordered (head, dim-pairs)
        w = w_cols.reshape(E, NH, HD // 2, 2)
        we, wo = w[..., 0], w[..., 1]
        c = fcos[None]                     # (1, NH, HD//2)
        s = fsin[None]
        return jnp.stack([we * c - wo * s, we * s + wo * c], axis=-1).reshape(E, E)

    scale = 1.0 / math.sqrt(HD)
    wq = rope_fold(fparams['wqkv_t'][:, 0:E]) * scale
    wk = rope_fold(fparams['wqkv_t'][:, E:2 * E])
    wv = fparams['wqkv_t'][:, 2 * E:3 * E]

    kparams = {
        'n1': fparams['n1'],
        'n2': fparams['n2'],
        'projb': fparams['projb'],
        'wqkv': jnp.concatenate([wq, wk, wv], axis=1).astype(jnp.bfloat16),  # (E, 3E)
        'wp': fparams['projw_t'].astype(jnp.bfloat16),                       # (E, E)
        'w12': jnp.concatenate([fparams['w1_t'], fparams['w2_t']],
                               axis=1).astype(jnp.bfloat16),                 # (E, HFF+E)
        'w3': fparams['w3_t'].astype(jnp.bfloat16),                          # (HFF, E)
    }

    x = jax.random.normal(ks[8], (B, S, E), jnp.float32)

    out = transformer_block(x, kparams, num_heads=NH, head_dim=HD,
                            hidden_dim=HFF, eps=eps)
    out = jax.block_until_ready(out)

    ref = reference(x, fparams, num_heads=NH, head_dim=HD, eps=eps,
                    freqs_cos=fcos, freqs_sin=fsin)
    assert out.shape == (B, S, E)
    err = float(jnp.max(jnp.abs(out - ref)))
    # bf16 matmul operands (incl. the RoPE-folded Q/K columns) + approximate softmax
    # reciprocal => ~1e-3-level deviation from the pure-f32 reference.
    if not bool(jnp.allclose(out, ref, rtol=2e-2, atol=2e-2)):
        raise SystemExit(f"mismatch: max abs err {err}")
    print("KERNEL_OK")
</pallas_src>

<mosaic_0001>
module attributes {stable_mosaic.version = 11 : i64} {
  func.func @transformer_block_kernel(%arg0: i32, %arg1: memref<1x8x32xf32, #tpu.memory_space<vmem>>, %arg2: memref<8x8xf32, #tpu.memory_space<vmem>>, %arg3: memref<1x32xf32, #tpu.memory_space<vmem>>, %arg4: memref<32x96xbf16, #tpu.memory_space<vmem>>, %arg5: memref<32x32xbf16, #tpu.memory_space<vmem>>, %arg6: memref<1x32xf32, #tpu.memory_space<vmem>>, %arg7: memref<1x32xf32, #tpu.memory_space<vmem>>, %arg8: memref<32x64xbf16, #tpu.memory_space<vmem>>, %arg9: memref<32x32xbf16, #tpu.memory_space<vmem>>, %arg10: memref<1x8x32xf32, #tpu.memory_space<vmem>>) attributes {dimension_semantics = [#tpu.dimension_semantics<parallel>], iteration_bounds = array<i64: 2>, scalar_prefetch = 0 : i64, scratch_operands = 0 : i64, tpu.core_type = #tpu.core_type<tc>, window_params = [{transform_indices = @transform_0, window_bounds = array<i64: 1, 8, 32>}, {pipeline_mode = #tpu.pipeline_mode<synchronous>, transform_indices = @transform_1, window_bounds = array<i64: 8, 8>}, {pipeline_mode = #tpu.pipeline_mode<synchronous>, transform_indices = @transform_2, window_bounds = array<i64: 1, 32>}, {pipeline_mode = #tpu.pipeline_mode<synchronous>, transform_indices = @transform_3, window_bounds = array<i64: 32, 96>}, {pipeline_mode = #tpu.pipeline_mode<synchronous>, transform_indices = @transform_4, window_bounds = array<i64: 32, 32>}, {pipeline_mode = #tpu.pipeline_mode<synchronous>, transform_indices = @transform_5, window_bounds = array<i64: 1, 32>}, {pipeline_mode = #tpu.pipeline_mode<synchronous>, transform_indices = @transform_6, window_bounds = array<i64: 1, 32>}, {pipeline_mode = #tpu.pipeline_mode<synchronous>, transform_indices = @transform_7, window_bounds = array<i64: 32, 64>}, {pipeline_mode = #tpu.pipeline_mode<synchronous>, transform_indices = @transform_8, window_bounds = array<i64: 32, 32>}, {transform_indices = @transform_9, window_bounds = array<i64: 1, 8, 32>}]} {
    %c0 = arith.constant 0 : index
    %c0_0 = arith.constant 0 : index
    %c0_1 = arith.constant 0 : index
    %0 = vector.load %arg1[%c0, %c0_0, %c0_1] : memref<1x8x32xf32, #tpu.memory_space<vmem>>, vector<1x8x32xf32>
    %1 = vector.shape_cast %0 : vector<1x8x32xf32> to vector<8x32xf32>
    %2 = arith.mulf %1, %1 : vector<8x32xf32>
    %cst = arith.constant dense<0.000000e+00> : vector<8xf32>
    %3 = vector.multi_reduction <add>, %2, %cst [1] : vector<8x32xf32> to vector<8xf32>
    %4 = vector.shape_cast %3 : vector<8xf32> to vector<8x1xf32>
    %cst_2 = arith.constant 3.200000e+01 : f32
    %5 = vector.broadcast %cst_2 : f32 to vector<8x1xf32>
    %6 = arith.divf %4, %5 : vector<8x1xf32>
    %cst_3 = arith.constant 1.1920929E-7 : f32
    %7 = vector.broadcast %cst_3 : f32 to vector<8x1xf32>
    %8 = arith.addf %6, %7 : vector<8x1xf32>
    %9 = math.rsqrt %8 : vector<8x1xf32>
    %10 = vector.broadcast %9 : vector<8x1xf32> to vector<8x32xf32>
    %11 = arith.mulf %1, %10 : vector<8x32xf32>
    %c0_4 = arith.constant 0 : index
    %c0_5 = arith.constant 0 : index
    %12 = vector.load %arg3[%c0_4, %c0_5] : memref<1x32xf32, #tpu.memory_space<vmem>>, vector<1x32xf32>
    %13 = vector.shape_cast %12 : vector<1x32xf32> to vector<32xf32>
    %14 = vector.shape_cast %13 : vector<32xf32> to vector<1x32xf32>
    %15 = vector.broadcast %14 : vector<1x32xf32> to vector<8x32xf32>
    %16 = arith.mulf %11, %15 : vector<8x32xf32>
    %17 = arith.truncf %16 : vector<8x32xf32> to vector<8x32xbf16>
    %c0_6 = arith.constant 0 : index
    %c0_7 = arith.constant 0 : index
    %18 = vector.load %arg4[%c0_6, %c0_7] : memref<32x96xbf16, #tpu.memory_space<vmem>>, vector<32x96xbf16>
    %cst_8 = arith.constant dense<0.000000e+00> : vector<8x96xf32>
    %19 = tpu.matmul %17, %18, %cst_8 {dimension_numbers = #tpu.dot_dimension_numbers<[1], [0], [0], [1], [0, 0, 1, 1], [], []>} : vector<8x32xbf16>, vector<32x96xbf16>, vector<8x96xf32> -> vector<8x96xf32>
    %20 = arith.truncf %19 : vector<8x96xf32> to vector<8x96xbf16>
    %21 = vector.extract_strided_slice %20 {offsets = [0, 0], sizes = [8, 32], strides = [1, 1]} : vector<8x96xbf16> to vector<8x32xbf16>
    %22 = vector.extract_strided_slice %21 {offsets = [0, 0], sizes = [8, 8], strides = [1, 1]} : vector<8x32xbf16> to vector<8x8xbf16>
    %23 = vector.extract_strided_slice %21 {offsets = [0, 8], sizes = [8, 8], strides = [1, 1]} : vector<8x32xbf16> to vector<8x8xbf16>
    %24 = vector.extract_strided_slice %21 {offsets = [0, 16], sizes = [8, 8], strides = [1, 1]} : vector<8x32xbf16> to vector<8x8xbf16>
    %25 = vector.extract_strided_slice %21 {offsets = [0, 24], sizes = [8, 8], strides = [1, 1]} : vector<8x32xbf16> to vector<8x8xbf16>
    %26 = vector.shape_cast %22 : vector<8x8xbf16> to vector<1x8x8xbf16>
    %27 = vector.shape_cast %23 : vector<8x8xbf16> to vector<1x8x8xbf16>
    %28 = vector.shape_cast %24 : vector<8x8xbf16> to vector<1x8x8xbf16>
    %29 = vector.shape_cast %25 : vector<8x8xbf16> to vector<1x8x8xbf16>
    %30 = tpu.concatenate %26, %27, %28, %29 in 0 : vector<1x8x8xbf16>, vector<1x8x8xbf16>, vector<1x8x8xbf16>, vector<1x8x8xbf16> -> vector<4x8x8xbf16>
    %31 = vector.extract_strided_slice %20 {offsets = [0, 32], sizes = [8, 32], strides = [1, 1]} : vector<8x96xbf16> to vector<8x32xbf16>
    %32 = vector.extract_strided_slice %31 {offsets = [0, 0], sizes = [8, 8], strides = [1, 1]} : vector<8x32xbf16> to vector<8x8xbf16>
    %33 = vector.extract_strided_slice %31 {offsets = [0, 8], sizes = [8, 8], strides = [1, 1]} : vector<8x32xbf16> to vector<8x8xbf16>
    %34 = vector.extract_strided_slice %31 {offsets = [0, 16], sizes = [8, 8], strides = [1, 1]} : vector<8x32xbf16> to vector<8x8xbf16>
    %35 = vector.extract_strided_slice %31 {offsets = [0, 24], sizes = [8, 8], strides = [1, 1]} : vector<8x32xbf16> to vector<8x8xbf16>
    %36 = vector.shape_cast %32 : vector<8x8xbf16> to vector<1x8x8xbf16>
    %37 = vector.shape_cast %33 : vector<8x8xbf16> to vector<1x8x8xbf16>
    %38 = vector.shape_cast %34 : vector<8x8xbf16> to vector<1x8x8xbf16>
    %39 = vector.shape_cast %35 : vector<8x8xbf16> to vector<1x8x8xbf16>
    %40 = tpu.concatenate %36, %37, %38, %39 in 0 : vector<1x8x8xbf16>, vector<1x8x8xbf16>, vector<1x8x8xbf16>, vector<1x8x8xbf16> -> vector<4x8x8xbf16>
    %41 = vector.extract_strided_slice %20 {offsets = [0, 64], sizes = [8, 32], strides = [1, 1]} : vector<8x96xbf16> to vector<8x32xbf16>
    %42 = vector.extract_strided_slice %41 {offsets = [0, 0], sizes = [8, 8], strides = [1, 1]} : vector<8x32xbf16> to vector<8x8xbf16>
    %43 = vector.extract_strided_slice %41 {offsets = [0, 8], sizes = [8, 8], strides = [1, 1]} : vector<8x32xbf16> to vector<8x8xbf16>
    %44 = vector.extract_strided_slice %41 {offsets = [0, 16], sizes = [8, 8], strides = [1, 1]} : vector<8x32xbf16> to vector<8x8xbf16>
    %45 = vector.extract_strided_slice %41 {offsets = [0, 24], sizes = [8, 8], strides = [1, 1]} : vector<8x32xbf16> to vector<8x8xbf16>
    %46 = vector.shape_cast %42 : vector<8x8xbf16> to vector<1x8x8xbf16>
    %47 = vector.shape_cast %43 : vector<8x8xbf16> to vector<1x8x8xbf16>
    %48 = vector.shape_cast %44 : vector<8x8xbf16> to vector<1x8x8xbf16>
    %49 = vector.shape_cast %45 : vector<8x8xbf16> to vector<1x8x8xbf16>
    %50 = tpu.concatenate %46, %47, %48, %49 in 0 : vector<1x8x8xbf16>, vector<1x8x8xbf16>, vector<1x8x8xbf16>, vector<1x8x8xbf16> -> vector<4x8x8xbf16>
    "tpu.trace_start"() <{level = 10 : i32, message = "hqd,hkd->hqk"}> : () -> ()
    %cst_9 = arith.constant dense<0.000000e+00> : vector<4x8x8xf32>
    %51 = tpu.matmul %30, %40, %cst_9 {dimension_numbers = #tpu.dot_dimension_numbers<[2], [2], [1], [1], [0, 0, 0, 1, 1, 1], [0], [0]>} : vector<4x8x8xbf16>, vector<4x8x8xbf16>, vector<4x8x8xf32> -> vector<4x8x8xf32>
    "tpu.trace_stop"() : () -> ()
    %c0_10 = arith.constant 0 : index
    %c0_11 = arith.constant 0 : index
    %52 = vector.load %arg2[%c0_10, %c0_11] : memref<8x8xf32, #tpu.memory_space<vmem>>, vector<8x8xf32>
    %53 = vector.shape_cast %52 : vector<8x8xf32> to vector<1x8x8xf32>
    %54 = vector.broadcast %53 : vector<1x8x8xf32> to vector<4x8x8xf32>
    %55 = arith.addf %51, %54 : vector<4x8x8xf32>
    %cst_12 = arith.constant dense<0xFF800000> : vector<4x8xf32>
    %56 = vector.multi_reduction <maximumf>, %55, %cst_12 [2] : vector<4x8x8xf32> to vector<4x8xf32>
    %57 = vector.shape_cast %56 : vector<4x8xf32> to vector<4x8x1xf32>
    %58 = vector.broadcast %57 : vector<4x8x1xf32> to vector<4x8x8xf32>
    %59 = arith.subf %55, %58 : vector<4x8x8xf32>
    %60 = math.exp %59 : vector<4x8x8xf32>
    %cst_13 = arith.constant dense<0.000000e+00> : vector<4x8xf32>
    %61 = vector.multi_reduction <add>, %60, %cst_13 [2] : vector<4x8x8xf32> to vector<4x8xf32>
    %62 = vector.shape_cast %61 : vector<4x8xf32> to vector<4x8x1xf32>
    %63 = tpu.reciprocal %62 {approx = true} : vector<4x8x1xf32> -> vector<4x8x1xf32>
    %64 = vector.broadcast %63 : vector<4x8x1xf32> to vector<4x8x8xf32>
    %65 = arith.mulf %60, %64 : vector<4x8x8xf32>
    %66 = arith.truncf %65 : vector<4x8x8xf32> to vector<4x8x8xbf16>
    "tpu.trace_start"() <{level = 10 : i32, message = "hqk,hkd->hqd"}> : () -> ()
    %cst_14 = arith.constant dense<0.000000e+00> : vector<4x8x8xf32>
    %67 = tpu.matmul %66, %50, %cst_14 {dimension_numbers = #tpu.dot_dimension_numbers<[2], [1], [1], [2], [0, 0, 0, 1, 1, 2], [0], [0]>} : vector<4x8x8xbf16>, vector<4x8x8xbf16>, vector<4x8x8xf32> -> vector<4x8x8xf32>
    "tpu.trace_stop"() : () -> ()
    %68 = vector.extract_strided_slice %67 {offsets = [0, 0, 0], sizes = [1, 8, 8], strides = [1, 1, 1]} : vector<4x8x8xf32> to vector<1x8x8xf32>
    %69 = vector.shape_cast %68 : vector<1x8x8xf32> to vector<8x8xf32>
    %70 = vector.extract_strided_slice %67 {offsets = [1, 0, 0], sizes = [1, 8, 8], strides = [1, 1, 1]} : vector<4x8x8xf32> to vector<1x8x8xf32>
    %71 = vector.shape_cast %70 : vector<1x8x8xf32> to vector<8x8xf32>
    %72 = vector.extract_strided_slice %67 {offsets = [2, 0, 0], sizes = [1, 8, 8], strides = [1, 1, 1]} : vector<4x8x8xf32> to vector<1x8x8xf32>
    %73 = vector.shape_cast %72 : vector<1x8x8xf32> to vector<8x8xf32>
    %74 = vector.extract_strided_slice %67 {offsets = [3, 0, 0], sizes = [1, 8, 8], strides = [1, 1, 1]} : vector<4x8x8xf32> to vector<1x8x8xf32>
    %75 = vector.shape_cast %74 : vector<1x8x8xf32> to vector<8x8xf32>
    %76 = tpu.concatenate %69, %71, %73, %75 in 1 : vector<8x8xf32>, vector<8x8xf32>, vector<8x8xf32>, vector<8x8xf32> -> vector<8x32xf32>
    %77 = arith.truncf %76 : vector<8x32xf32> to vector<8x32xbf16>
    %c0_15 = arith.constant 0 : index
    %c0_16 = arith.constant 0 : index
    %78 = vector.load %arg5[%c0_15, %c0_16] : memref<32x32xbf16, #tpu.memory_space<vmem>>, vector<32x32xbf16>
    %cst_17 = arith.constant dense<0.000000e+00> : vector<8x32xf32>
    %79 = tpu.matmul %77, %78, %cst_17 {dimension_numbers = #tpu.dot_dimension_numbers<[1], [0], [0], [1], [0, 0, 1, 1], [], []>} : vector<8x32xbf16>, vector<32x32xbf16>, vector<8x32xf32> -> vector<8x32xf32>
    %c0_18 = arith.constant 0 : index
    %c0_19 = arith.constant 0 : index
    %80 = vector.load %arg6[%c0_18, %c0_19] : memref<1x32xf32, #tpu.memory_space<vmem>>, vector<1x32xf32>
    %81 = vector.shape_cast %80 : vector<1x32xf32> to vector<32xf32>
    %82 = vector.shape_cast %81 : vector<32xf32> to vector<1x32xf32>
    %83 = vector.broadcast %82 : vector<1x32xf32> to vector<8x32xf32>
    %84 = arith.addf %79, %83 : vector<8x32xf32>
    %85 = arith.addf %1, %84 : vector<8x32xf32>
    %86 = arith.mulf %85, %85 : vector<8x32xf32>
    %cst_20 = arith.constant dense<0.000000e+00> : vector<8xf32>
    %87 = vector.multi_reduction <add>, %86, %cst_20 [1] : vector<8x32xf32> to vector<8xf32>
    %88 = vector.shape_cast %87 : vector<8xf32> to vector<8x1xf32>
    %cst_21 = arith.constant 3.200000e+01 : f32
    %89 = vector.broadcast %cst_21 : f32 to vector<8x1xf32>
    %90 = arith.divf %88, %89 : vector<8x1xf32>
    %cst_22 = arith.constant 1.1920929E-7 : f32
    %91 = vector.broadcast %cst_22 : f32 to vector<8x1xf32>
    %92 = arith.addf %90, %91 : vector<8x1xf32>
    %93 = math.rsqrt %92 : vector<8x1xf32>
    %94 = vector.broadcast %93 : vector<8x1xf32> to vector<8x32xf32>
    %95 = arith.mulf %85, %94 : vector<8x32xf32>
    %c0_23 = arith.constant 0 : index
    %c0_24 = arith.constant 0 : index
    %96 = vector.load %arg7[%c0_23, %c0_24] : memref<1x32xf32, #tpu.memory_space<vmem>>, vector<1x32xf32>
    %97 = vector.shape_cast %96 : vector<1x32xf32> to vector<32xf32>
    %98 = vector.shape_cast %97 : vector<32xf32> to vector<1x32xf32>
    %99 = vector.broadcast %98 : vector<1x32xf32> to vector<8x32xf32>
    %100 = arith.mulf %95, %99 : vector<8x32xf32>
    %101 = arith.truncf %100 : vector<8x32xf32> to vector<8x32xbf16>
    %c0_25 = arith.constant 0 : index
    %c0_26 = arith.constant 0 : index
    %102 = vector.load %arg8[%c0_25, %c0_26] : memref<32x64xbf16, #tpu.memory_space<vmem>>, vector<32x64xbf16>
    %cst_27 = arith.constant dense<0.000000e+00> : vector<8x64xf32>
    %103 = tpu.matmul %101, %102, %cst_27 {dimension_numbers = #tpu.dot_dimension_numbers<[1], [0], [0], [1], [0, 0, 1, 1], [], []>} : vector<8x32xbf16>, vector<32x64xbf16>, vector<8x64xf32> -> vector<8x64xf32>
    %104 = vector.extract_strided_slice %103 {offsets = [0, 0], sizes = [8, 32], strides = [1, 1]} : vector<8x64xf32> to vector<8x32xf32>
    %105 = vector.extract_strided_slice %103 {offsets = [0, 32], sizes = [8, 32], strides = [1, 1]} : vector<8x64xf32> to vector<8x32xf32>
    %106 = arith.negf %104 : vector<8x32xf32>
    %107 = math.exp %106 : vector<8x32xf32>
    %cst_28 = arith.constant 1.000000e+00 : f32
    %108 = vector.broadcast %cst_28 : f32 to vector<8x32xf32>
    %109 = arith.addf %108, %107 : vector<8x32xf32>
    %110 = arith.divf %108, %109 : vector<8x32xf32>
    %111 = arith.mulf %104, %110 : vector<8x32xf32>
    %112 = arith.mulf %111, %105 : vector<8x32xf32>
    %113 = arith.truncf %112 : vector<8x32xf32> to vector<8x32xbf16>
    %c0_29 = arith.constant 0 : index
    %c0_30 = arith.constant 0 : index
    %114 = vector.load %arg9[%c0_29, %c0_30] : memref<32x32xbf16, #tpu.memory_space<vmem>>, vector<32x32xbf16>
    %cst_31 = arith.constant dense<0.000000e+00> : vector<8x32xf32>
    %115 = tpu.matmul %113, %114, %cst_31 {dimension_numbers = #tpu.dot_dimension_numbers<[1], [0], [0], [1], [0, 0, 1, 1], [], []>} : vector<8x32xbf16>, vector<32x32xbf16>, vector<8x32xf32> -> vector<8x32xf32>
    %116 = arith.addf %85, %115 : vector<8x32xf32>
    %117 = vector.shape_cast %116 : vector<8x32xf32> to vector<1x8x32xf32>
    %c0_32 = arith.constant 0 : index
    %c0_33 = arith.constant 0 : index
    %c0_34 = arith.constant 0 : index
    %118 = vector.load %arg10[%c0_32, %c0_33, %c0_34] : memref<1x8x32xf32, #tpu.memory_space<vmem>>, vector<1x8x32xf32>
    tpu.vector_store %arg10[%c0_32, %c0_33, %c0_34], %117 {strides = array<i32>} : memref<1x8x32xf32, #tpu.memory_space<vmem>>, vector<1x8x32xf32>,
    return
  }
  func.func @transform_0(%arg0: i32) -> (i32, i32, i32) {
    %c0_i32 = arith.constant 0 : i32
    %c0_i32_0 = arith.constant 0 : i32
    %c0_i32_1 = arith.constant 0 : i32
    return %arg0, %c0_i32, %c0_i32_0 : i32, i32, i32
  }
  func.func @transform_1(%arg0: i32) -> (i32, i32) {
    %c0_i32 = arith.constant 0 : i32
    %c0_i32_0 = arith.constant 0 : i32
    %c0_i32_1 = arith.constant 0 : i32
    return %c0_i32, %c0_i32_0 : i32, i32
  }
  func.func @transform_2(%arg0: i32) -> (i32, i32) {
    %c0_i32 = arith.constant 0 : i32
    %c0_i32_0 = arith.constant 0 : i32
    %c0_i32_1 = arith.constant 0 : i32
    return %c0_i32, %c0_i32_0 : i32, i32
  }
  func.func @transform_3(%arg0: i32) -> (i32, i32) {
    %c0_i32 = arith.constant 0 : i32
    %c0_i32_0 = arith.constant 0 : i32
    %c0_i32_1 = arith.constant 0 : i32
    return %c0_i32, %c0_i32_0 : i32, i32
  }
  func.func @transform_4(%arg0: i32) -> (i32, i32) {
    %c0_i32 = arith.constant 0 : i32
    %c0_i32_0 = arith.constant 0 : i32
    %c0_i32_1 = arith.constant 0 : i32
    return %c0_i32, %c0_i32_0 : i32, i32
  }
  func.func @transform_5(%arg0: i32) -> (i32, i32) {
    %c0_i32 = arith.constant 0 : i32
    %c0_i32_0 = arith.constant 0 : i32
    %c0_i32_1 = arith.constant 0 : i32
    return %c0_i32, %c0_i32_0 : i32, i32
  }
  func.func @transform_6(%arg0: i32) -> (i32, i32) {
    %c0_i32 = arith.constant 0 : i32
    %c0_i32_0 = arith.constant 0 : i32
    %c0_i32_1 = arith.constant 0 : i32
    return %c0_i32, %c0_i32_0 : i32, i32
  }
  func.func @transform_7(%arg0: i32) -> (i32, i32) {
    %c0_i32 = arith.constant 0 : i32
    %c0_i32_0 = arith.constant 0 : i32
    %c0_i32_1 = arith.constant 0 : i32
    return %c0_i32, %c0_i32_0 : i32, i32
  }
  func.func @transform_8(%arg0: i32) -> (i32, i32) {
    %c0_i32 = arith.constant 0 : i32
    %c0_i32_0 = arith.constant 0 : i32
    %c0_i32_1 = arith.constant 0 : i32
    return %c0_i32, %c0_i32_0 : i32, i32
  }
  func.func @transform_9(%arg0: i32) -> (i32, i32, i32) {
    %c0_i32 = arith.constant 0 : i32
    %c0_i32_0 = arith.constant 0 : i32
    %c0_i32_1 = arith.constant 0 : i32
    return %arg0, %c0_i32, %c0_i32_0 : i32, i32, i32
  }
}

</mosaic_0001>

<llo_original>
// kernel: tpu_custom_call.1
$region0: #{tpu_custom_call.1}
  #allocation0 [shape = 'u32[]', space=smem, size = 0x4, offset = 0x4, fixed_abs, tag = 'smem constant byte address 0x4 - core index']
  #allocation1 [shape = 'u32[144,128]{1,0:T(1,128)}', space=vmem, size = 0x12000, scoped, tag = 'internal scratch']
  %s0 = inlined_call_operand.hbm [shape: f32[2,8,32], index: 0, kind: input, shape index: {}]
  %s1 = inlined_call_operand.hbm [shape: f32[8,8], index: 1, kind: input, shape index: {}]
  %s2 = inlined_call_operand.vmem [shape: f32[1,32], index: 2, kind: input, shape index: {}]
  %s3 = inlined_call_operand.hbm [shape: bf16[32,96], index: 3, kind: input, shape index: {}]
  %s4 = inlined_call_operand.hbm [shape: bf16[32,32], index: 4, kind: input, shape index: {}]
  %s5 = inlined_call_operand.vmem [shape: f32[1,32], index: 5, kind: input, shape index: {}]
  %s6 = inlined_call_operand.vmem [shape: f32[1,32], index: 6, kind: input, shape index: {}]
  %s7 = inlined_call_operand.vmem [shape: bf16[32,64], index: 7, kind: input, shape index: {}]
  %s8 = inlined_call_operand.hbm [shape: bf16[32,32], index: 8, kind: input, shape index: {}]
  %s9 = inlined_call_operand.hbm [shape: f32[2,8,32], index: 9, kind: output, shape index: {}]
  %s10 = sld [smem:[#allocation0]]
  $region89: #{tpu_custom_call.1} parent=0
    _
  %s12 = ssub.s32 1, %s10
  %s13 = scalar_select 0, %s12, %s10
  $region1: #{tpu_custom_call.1} parent=0
    #allocation2 [shape = 'u8[8192]{0}', space=vmem, size = 0x2000, scoped, tag = 'input window, operand 0']
    #allocation3 [shape = 's32[2]{0}', space=sflag, size = 0x8, scoped, tag = 'scoped memory for tpu_custom_call.1']
    #allocation4 [shape = 's32[2]{0}', space=sflag, size = 0x8, scoped, tag = 'scoped memory for tpu_custom_call.1']
    #allocation5 [shape = 'u8[4096]{0}', space=vmem, size = 0x1000, scoped, tag = 'input window, operand 1, single buffered']
    #allocation6 [shape = 's32[1]{0}', space=sflag, size = 0x4, scoped, tag = 'scoped memory for tpu_custom_call.1']
    #allocation7 [shape = 'u8[8192]{0}', space=vmem, size = 0x2000, scoped, tag = 'input window, operand 3, single buffered']
    #allocation8 [shape = 'u8[8192]{0}', space=vmem, size = 0x2000, scoped, tag = 'input window, operand 4, single buffered']
    #allocation9 [shape = 's32[1]{0}', space=sflag, size = 0x4, scoped, tag = 'scoped memory for tpu_custom_call.1']
    #allocation10 [shape = 'u8[8192]{0}', space=vmem, size = 0x2000, scoped, tag = 'input window, operand 8, single buffered']
    #allocation11 [shape = 'u8[8192]{0}', space=vmem, size = 0x2000, scoped, tag = 'output window, operand 0']
    %14 = vsyncpa [#allocation3], 0
    %s15 = scalar_lea.sflag [#allocation3], 1
    %16 = vsyncpa %s15, 0
    %17 = vsyncpa [#allocation6], 0
    %18 = vsyncpa [#allocation9], 0
    %19 = vsyncpa [#allocation4], 0
    %s20 = scalar_lea.sflag [#allocation4], 1
    %21 = vsyncpa %s20, 0
    loop: start=0, step=1, limit=4
    $region2: #{tpu_custom_call.1} parent=1 // loop_pre_header
      _
    $region3: #{tpu_custom_call.1} parent=1 // loop_header
      %s23 = sphi 0, %s27
      %p24 = scmp.ge.s32.totalorder %s23, 4
      %s33 = sphi 0, %s35
      %s36 = sphi 0, %s33
      %s37 = sphi 0, %s36
      %s53 = sphi 0, %s37
      %s57 = sphi 0, %s57
      %s59 = sphi 0, %s57
      %s60 = sphi 0, %s59
      %s74 = sphi 0, %s60
      %s78 = sphi 0, %s78
      %s80 = sphi 0, %s78
      %s81 = sphi 0, %s80
      %s95 = sphi 0, %s81
      %s99 = sphi 0, %s99
      %s101 = sphi 0, %s99
      %s102 = sphi 0, %s101
      %s116 = sphi 0, %s102
      %s120 = sphi 0, %s120
      %s122 = sphi 0, %s120
      %s123 = sphi 0, %s122
      %s137 = sphi 0, %s123
      %s141 = sphi 0, %s141
      %s143 = sphi 0, %s141
      %s144 = sphi 0, %s143
      %s158 = sphi 0, %s144
      %s162 = sphi 0, %s162
      %s164 = sphi 0, %s162
      %s165 = sphi 0, %s164
      %s179 = sphi 0, %s165
      %s183 = sphi 0, %s183
      %s185 = sphi 0, %s183
      %s186 = sphi 0, %s185
      %s200 = sphi 0, %s186
      %s204 = sphi 0, %s204
      %s206 = sphi 0, %s204
      %s207 = sphi 0, %s206
      %s221 = sphi 0, %s207
      %s227 = sphi 0, %s229
      %s230 = sphi 0, %s227
      %s231 = sphi 0, %s230
      %s247 = sphi 0, %s231
    $region4: #{tpu_custom_call.1} parent=1 // loop_header_branch
      %26 = sbr.rel (%p24) target = $region8
    $region5: #{tpu_custom_call.1} parent=1 // loop_body
      %s28 = ssub.s32 %s23, 1
      %s29 = ssub.s32 %s23, 2
      %s30 = sadd.s32 %s23, 1
      %s31 = ssub.s32 %s23, %s30
      %p32 = scmp.eq.s32.totalorder %s31, 0
      %s34 = sadd.s32 %s33, 1
      %s35 = scalar_select %p32, %s33, %s34
      %p38 = pneg %p32
      %p39 = scmp.eq.s32.totalorder %s23, 1
      %p40 = por %p38, %p39
      %p41 = scmp.ne.s32.totalorder %s33, %s36
      %p42 = scmp.eq.s32.totalorder %s23, 0
      %p43 = por %p41, %p42
      %p44 = scmp.ne.s32.totalorder %s33, %s36
      %p45 = scmp.eq.s32.totalorder %s28, 1
      %p46 = por %p44, %p45
      %p47 = scmp.ne.s32.totalorder %s36, %s37
      %p48 = scmp.eq.s32.totalorder %s28, 0
      %p49 = por %p47, %p48
      %p50 = scmp.ne.s32.totalorder %s36, %s37
      %p51 = scmp.eq.s32.totalorder %s29, 1
      %p52 = por %p50, %p51
      %p54 = scmp.ne.s32.totalorder %s37, %s53
      %p55 = scmp.eq.s32.totalorder %s29, 0
      %p56 = por %p54, %p55
      %s58 = sadd.s32 %s57, 1
      %p61 = scmp.eq.s32.totalorder %s23, 1
      %p62 = scmp.ne.s32.totalorder %s57, %s59
      %p63 = scmp.eq.s32.totalorder %s23, 0
      %p64 = por %p62, %p63
      %p65 = scmp.ne.s32.totalorder %s57, %s59
      %p66 = scmp.eq.s32.totalorder %s28, 1
      %p67 = por %p65, %p66
      %p68 = scmp.ne.s32.totalorder %s59, %s60
      %p69 = scmp.eq.s32.totalorder %s28, 0
      %p70 = por %p68, %p69
      %p71 = scmp.ne.s32.totalorder %s59, %s60
      %p72 = scmp.eq.s32.totalorder %s29, 1
      %p73 = por %p71, %p72
      %p75 = scmp.ne.s32.totalorder %s60, %s74
      %p76 = scmp.eq.s32.totalorder %s29, 0
      %p77 = por %p75, %p76
      %s79 = sadd.s32 %s78, 1
      %p82 = scmp.eq.s32.totalorder %s23, 1
      %p83 = scmp.ne.s32.totalorder %s78, %s80
      %p84 = scmp.eq.s32.totalorder %s23, 0
      %p85 = por %p83, %p84
      %p86 = scmp.ne.s32.totalorder %s78, %s80
      %p87 = scmp.eq.s32.totalorder %s28, 1
      %p88 = por %p86, %p87
      %p89 = scmp.ne.s32.totalorder %s80, %s81
      %p90 = scmp.eq.s32.totalorder %s28, 0
      %p91 = por %p89, %p90
      %p92 = scmp.ne.s32.totalorder %s80, %s81
      %p93 = scmp.eq.s32.totalorder %s29, 1
      %p94 = por %p92, %p93
      %p96 = scmp.ne.s32.totalorder %s81, %s95
      %p97 = scmp.eq.s32.totalorder %s29, 0
      %p98 = por %p96, %p97
      %s100 = sadd.s32 %s99, 1
      %p103 = scmp.eq.s32.totalorder %s23, 1
      %p104 = scmp.ne.s32.totalorder %s99, %s101
      %p105 = scmp.eq.s32.totalorder %s23, 0
      %p106 = por %p104, %p105
      %p107 = scmp.ne.s32.totalorder %s99, %s101
      %p108 = scmp.eq.s32.totalorder %s28, 1
      %p109 = por %p107, %p108
      %p110 = scmp.ne.s32.totalorder %s101, %s102
      %p111 = scmp.eq.s32.totalorder %s28, 0
      %p112 = por %p110, %p111
      %p113 = scmp.ne.s32.totalorder %s101, %s102
      %p114 = scmp.eq.s32.totalorder %s29, 1
      %p115 = por %p113, %p114
      %p117 = scmp.ne.s32.totalorder %s102, %s116
      %p118 = scmp.eq.s32.totalorder %s29, 0
      %p119 = por %p117, %p118
      %s121 = sadd.s32 %s120, 1
      %p124 = scmp.eq.s32.totalorder %s23, 1
      %p125 = scmp.ne.s32.totalorder %s120, %s122
      %p126 = scmp.eq.s32.totalorder %s23, 0
      %p127 = por %p125, %p126
      %p128 = scmp.ne.s32.totalorder %s120, %s122
      %p129 = scmp.eq.s32.totalorder %s28, 1
      %p130 = por %p128, %p129
      %p131 = scmp.ne.s32.totalorder %s122, %s123
      %p132 = scmp.eq.s32.totalorder %s28, 0
      %p133 = por %p131, %p132
      %p134 = scmp.ne.s32.totalorder %s122, %s123
      %p135 = scmp.eq.s32.totalorder %s29, 1
      %p136 = por %p134, %p135
      %p138 = scmp.ne.s32.totalorder %s123, %s137
      %p139 = scmp.eq.s32.totalorder %s29, 0
      %p140 = por %p138, %p139
      %s142 = sadd.s32 %s141, 1
      %p145 = scmp.eq.s32.totalorder %s23, 1
      %p146 = scmp.ne.s32.totalorder %s141, %s143
      %p147 = scmp.eq.s32.totalorder %s23, 0
      %p148 = por %p146, %p147
      %p149 = scmp.ne.s32.totalorder %s141, %s143
      %p150 = scmp.eq.s32.totalorder %s28, 1
      %p151 = por %p149, %p150
      %p152 = scmp.ne.s32.totalorder %s143, %s144
      %p153 = scmp.eq.s32.totalorder %s28, 0
      %p154 = por %p152, %p153
      %p155 = scmp.ne.s32.totalorder %s143, %s144
      %p156 = scmp.eq.s32.totalorder %s29, 1
      %p157 = por %p155, %p156
      %p159 = scmp.ne.s32.totalorder %s144, %s158
      %p160 = scmp.eq.s32.totalorder %s29, 0
      %p161 = por %p159, %p160
      %s163 = sadd.s32 %s162, 1
      %p166 = scmp.eq.s32.totalorder %s23, 1
      %p167 = scmp.ne.s32.totalorder %s162, %s164
      %p168 = scmp.eq.s32.totalorder %s23, 0
      %p169 = por %p167, %p168
      %p170 = scmp.ne.s32.totalorder %s162, %s164
      %p171 = scmp.eq.s32.totalorder %s28, 1
      %p172 = por %p170, %p171
      %p173 = scmp.ne.s32.totalorder %s164, %s165
      %p174 = scmp.eq.s32.totalorder %s28, 0
      %p175 = por %p173, %p174
      %p176 = scmp.ne.s32.totalorder %s164, %s165
      %p177 = scmp.eq.s32.totalorder %s29, 1
      %p178 = por %p176, %p177
      %p180 = scmp.ne.s32.totalorder %s165, %s179
      %p181 = scmp.eq.s32.totalorder %s29, 0
      %p182 = por %p180, %p181
      %s184 = sadd.s32 %s183, 1
      %p187 = scmp.eq.s32.totalorder %s23, 1
      %p188 = scmp.ne.s32.totalorder %s183, %s185
      %p189 = scmp.eq.s32.totalorder %s23, 0
      %p190 = por %p188, %p189
      %p191 = scmp.ne.s32.totalorder %s183, %s185
      %p192 = scmp.eq.s32.totalorder %s28, 1
      %p193 = por %p191, %p192
      %p194 = scmp.ne.s32.totalorder %s185, %s186
      %p195 = scmp.eq.s32.totalorder %s28, 0
      %p196 = por %p194, %p195
      %p197 = scmp.ne.s32.totalorder %s185, %s186
      %p198 = scmp.eq.s32.totalorder %s29, 1
      %p199 = por %p197, %p198
      %p201 = scmp.ne.s32.totalorder %s186, %s200
      %p202 = scmp.eq.s32.totalorder %s29, 0
      %p203 = por %p201, %p202
      %s205 = sadd.s32 %s204, 1
      %p208 = scmp.eq.s32.totalorder %s23, 1
      %p209 = scmp.ne.s32.totalorder %s204, %s206
      %p210 = scmp.eq.s32.totalorder %s23, 0
      %p211 = por %p209, %p210
      %p212 = scmp.ne.s32.totalorder %s204, %s206
      %p213 = scmp.eq.s32.totalorder %s28, 1
      %p214 = por %p212, %p213
      %p215 = scmp.ne.s32.totalorder %s206, %s207
      %p216 = scmp.eq.s32.totalorder %s28, 0
      %p217 = por %p215, %p216
      %p218 = scmp.ne.s32.totalorder %s206, %s207
      %p219 = scmp.eq.s32.totalorder %s29, 1
      %p220 = por %p218, %p219
      %p222 = scmp.ne.s32.totalorder %s207, %s221
      %p223 = scmp.eq.s32.totalorder %s29, 0
      %p224 = por %p222, %p223
      %s225 = ssub.s32 %s23, %s30
      %p226 = scmp.eq.s32.totalorder %s225, 0
      %s228 = sadd.s32 %s227, 1
      %s229 = scalar_select %p226, %s227, %s228
      %p232 = pneg %p226
      %p233 = scmp.eq.s32.totalorder %s23, 1
      %p234 = por %p232, %p233
      %p235 = scmp.ne.s32.totalorder %s227, %s230
      %p236 = scmp.eq.s32.totalorder %s23, 0
      %p237 = por %p235, %p236
      %p238 = scmp.ne.s32.totalorder %s227, %s230
      %p239 = scmp.eq.s32.totalorder %s28, 1
      %p240 = por %p238, %p239
      %p241 = scmp.ne.s32.totalorder %s230, %s231
      %p242 = scmp.eq.s32.totalorder %s28, 0
      %p243 = por %p241, %p242
      %p244 = scmp.ne.s32.totalorder %s230, %s231
      %p245 = scmp.eq.s32.totalorder %s29, 1
      %p246 = por %p244, %p245
      %p248 = scmp.ne.s32.totalorder %s231, %s247
      %p249 = scmp.eq.s32.totalorder %s29, 0
      %p250 = por %p248, %p249
      %p251 = scmp.le.s32.totalorder 1, %s23
      %p252 = scmp.lt.s32.totalorder %s23, 3
      %p253 = pnand %p251, %p252
      %p254 = pneg %p253
      // Predicated region
      $region9: #{tpu_custom_call.1} parent=5 // pred_check
        _
      $region10: #{tpu_custom_call.1} parent=5 // pred_check_branch
        %256 = sbr.rel (%p253) target = $region12
      $region11: #{tpu_custom_call.1} parent=5 // pred_region
        %s257 = ssub.s32 %s23, 1
        // Predicated region
        $region13: #{tpu_custom_call.1} parent=11 // pred_check
          %p258 = pneg %p70
        $region14: #{tpu_custom_call.1} parent=11 // pred_check_branch
          %260 = sbr.rel (%p258) target = $region16
        $region15: #{tpu_custom_call.1} parent=11 // pred_region
          %s262 = ssub.s32 128, 128
          %263 = vsyncadd [#allocation6], %s262
          %s265 = sshll.u32 [#allocation5], 4
          %s266 = int_to_ptr.vmem [resolvable:$true] %s265
          %268 = dma.hbm_to_vmem [thread:$0]  %s1, 128, %s266, [#allocation6]
        $region16: #{tpu_custom_call.1} parent=11 // pred_fallthru
          _
        // Predicated region
        $region17: #{tpu_custom_call.1} parent=11 // pred_check
          %p269 = pneg %p91
        $region18: #{tpu_custom_call.1} parent=11 // pred_check_branch
          %271 = sbr.rel (%p269) target = $region20
        $region19: #{tpu_custom_call.1} parent=11 // pred_region
          _
        $region20: #{tpu_custom_call.1} parent=11 // pred_fallthru
          _
        // Predicated region
        $region21: #{tpu_custom_call.1} parent=11 // pred_check
          %p272 = pneg %p112
        $region22: #{tpu_custom_call.1} parent=11 // pred_check_branch
          %274 = sbr.rel (%p272) target = $region24
        $region23: #{tpu_custom_call.1} parent=11 // pred_region
          %s276 = ssub.s32 256, 256
          %277 = vsyncadd [#allocation6], %s276
          %s278 = sshll.u32 [#allocation7], 4
          %s279 = int_to_ptr.vmem [resolvable:$true] %s278
          %284 = dma.hbm_to_vmem [thread:$0]  %s3, 256, %s279, [#allocation6], 64, 64, 4
        $region24: #{tpu_custom_call.1} parent=11 // pred_fallthru
          _
        // Predicated region
        $region25: #{tpu_custom_call.1} parent=11 // pred_check
          %p285 = pneg %p133
        $region26: #{tpu_custom_call.1} parent=11 // pred_check_branch
          %287 = sbr.rel (%p285) target = $region28
        $region27: #{tpu_custom_call.1} parent=11 // pred_region
          %s289 = ssub.s32 256, 256
          %290 = vsyncadd [#allocation9], %s289
          %s291 = sshll.u32 [#allocation8], 4
          %s292 = int_to_ptr.vmem [resolvable:$true] %s291
          %297 = dma.hbm_to_vmem [thread:$0]  %s4, 256, %s292, [#allocation9], 64, 64, 4
        $region28: #{tpu_custom_call.1} parent=11 // pred_fallthru
          _
        // Predicated region
        $region29: #{tpu_custom_call.1} parent=11 // pred_check
          %p298 = pneg %p154
        $region30: #{tpu_custom_call.1} parent=11 // pred_check_branch
          %300 = sbr.rel (%p298) target = $region32
        $region31: #{tpu_custom_call.1} parent=11 // pred_region
          _
        $region32: #{tpu_custom_call.1} parent=11 // pred_fallthru
          _
        // Predicated region
        $region33: #{tpu_custom_call.1} parent=11 // pred_check
          %p301 = pneg %p175
        $region34: #{tpu_custom_call.1} parent=11 // pred_check_branch
          %303 = sbr.rel (%p301) target = $region36
        $region35: #{tpu_custom_call.1} parent=11 // pred_region
          _
        $region36: #{tpu_custom_call.1} parent=11 // pred_fallthru
          _
        // Predicated region
        $region37: #{tpu_custom_call.1} parent=11 // pred_check
          %p304 = pneg %p196
        $region38: #{tpu_custom_call.1} parent=11 // pred_check_branch
          %306 = sbr.rel (%p304) target = $region40
        $region39: #{tpu_custom_call.1} parent=11 // pred_region
          _
        $region40: #{tpu_custom_call.1} parent=11 // pred_fallthru
          _
        // Predicated region
        $region41: #{tpu_custom_call.1} parent=11 // pred_check
          %p307 = pneg %p217
        $region42: #{tpu_custom_call.1} parent=11 // pred_check_branch
          %309 = sbr.rel (%p307) target = $region44
        $region43: #{tpu_custom_call.1} parent=11 // pred_region
          %s311 = ssub.s32 256, 256
          %312 = vsyncadd [#allocation9], %s311
          %s313 = sshll.u32 [#allocation10], 4
          %s314 = int_to_ptr.vmem [resolvable:$true] %s313
          %319 = dma.hbm_to_vmem [thread:$0]  %s8, 256, %s314, [#allocation9], 64, 64, 4
        $region44: #{tpu_custom_call.1} parent=11 // pred_fallthru
          _
      $region12: #{tpu_custom_call.1} parent=5 // pred_fallthru
        _
      %p320 = scmp.lt.s32.totalorder %s23, 2
      // Predicated region
      $region45: #{tpu_custom_call.1} parent=5 // pred_check
        %p321 = pneg %p320
      $region46: #{tpu_custom_call.1} parent=5 // pred_check_branch
        %323 = sbr.rel (%p321) target = $region48
      $region47: #{tpu_custom_call.1} parent=5 // pred_region
        // Predicated region
        $region49: #{tpu_custom_call.1} parent=47 // pred_check
          %p324 = pneg %p43
        $region50: #{tpu_custom_call.1} parent=47 // pred_check_branch
          %326 = sbr.rel (%p324) target = $region52
        $region51: #{tpu_custom_call.1} parent=47 // pred_region
          %s327 = sand.u32 %s33, 1
          %s328 = scalar_lea.sflag [#allocation3], %s327
          %s329 = sand.u32 %s33, 1
          %s330 = smul.addr %s329, 8
          %s331 = scalar_lea.vmem [#allocation2], %s330
          %s333 = ssub.s32 128, 128
          %334 = vsyncadd %s328, %s333
          %s335 = smul.addr %s23, 128
          %s336 = scalar_lea.hbm %s0, %s335
          %s338 = sshll.u32 %s331, 4
          %s339 = int_to_ptr.vmem [resolvable:$true] %s338
          %341 = dma.hbm_to_vmem [thread:$0]  %s336, 128, %s339, %s328
        $region52: #{tpu_custom_call.1} parent=47 // pred_fallthru
          _
      $region48: #{tpu_custom_call.1} parent=5 // pred_fallthru
        _
      %p342 = scmp.le.s32.totalorder 1, %s23
      %p343 = scmp.lt.s32.totalorder %s23, 3
      %p344 = pnand %p342, %p343
      %p345 = pneg %p344
      // Predicated region
      $region53: #{tpu_custom_call.1} parent=5 // pred_check
        _
      $region54: #{tpu_custom_call.1} parent=5 // pred_check_branch
        %347 = sbr.rel (%p344) target = $region56
      $region55: #{tpu_custom_call.1} parent=5 // pred_region
        %s348 = ssub.s32 %s23, 1
        %s349 = sand.u32 %s36, 1
        %s350 = scalar_lea.sflag [#allocation3], %s349
        %s351 = sand.u32 %s36, 1
        %s352 = smul.addr %s351, 8
        %s353 = scalar_lea.vmem [#allocation2], %s352
        // Predicated region
        $region57: #{tpu_custom_call.1} parent=55 // pred_check
          %p354 = pneg %p49
        $region58: #{tpu_custom_call.1} parent=55 // pred_check_branch
          %356 = sbr.rel (%p354) target = $region60
        $region59: #{tpu_custom_call.1} parent=55 // pred_region
          %357 = dma.done %s350, 128
        $region60: #{tpu_custom_call.1} parent=55 // pred_fallthru
          _
        // Predicated region
        $region61: #{tpu_custom_call.1} parent=55 // pred_check
          %p358 = pneg %p70
        $region62: #{tpu_custom_call.1} parent=55 // pred_check_branch
          %360 = sbr.rel (%p358) target = $region64
        $region63: #{tpu_custom_call.1} parent=55 // pred_region
          %361 = dma.done [#allocation6], 128
        $region64: #{tpu_custom_call.1} parent=55 // pred_fallthru
          _
        // Predicated region
        $region65: #{tpu_custom_call.1} parent=55 // pred_check
          %p362 = pneg %p112
        $region66: #{tpu_custom_call.1} parent=55 // pred_check_branch
          %364 = sbr.rel (%p362) target = $region68
        $region67: #{tpu_custom_call.1} parent=55 // pred_region
          %365 = dma.done [#allocation6], 256
        $region68: #{tpu_custom_call.1} parent=55 // pred_fallthru
          _
        // Predicated region
        $region69: #{tpu_custom_call.1} parent=55 // pred_check
          %p366 = pneg %p133
        $region70: #{tpu_custom_call.1} parent=55 // pred_check_branch
          %368 = sbr.rel (%p366) target = $region72
        $region71: #{tpu_custom_call.1} parent=55 // pred_region
          %369 = dma.done [#allocation9], 256
        $region72: #{tpu_custom_call.1} parent=55 // pred_fallthru
          _
        // Predicated region
        $region73: #{tpu_custom_call.1} parent=55 // pred_check
          %p370 = pneg %p217
        $region74: #{tpu_custom_call.1} parent=55 // pred_check_branch
          %372 = sbr.rel (%p370) target = $region76
        $region75: #{tpu_custom_call.1} parent=55 // pred_region
          %373 = dma.done [#allocation9], 256
        $region76: #{tpu_custom_call.1} parent=55 // pred_fallthru
          _
        %s374 = sand.u32 %s36, 1
        %s375 = scalar_lea.sflag [#allocation3], %s374
        %s376 = sand.u32 %s36, 1
        %s377 = smul.addr %s376, 8
        %s378 = scalar_lea.vmem [#allocation2], %s377
        %p379 = pneg %p49
        %p380 = pneg %p46
        %p381 = pneg %p70
        %p382 = pneg %p67
        %p383 = pneg %p91
        %p384 = pneg %p88
        %p385 = pneg %p112
        %p386 = pneg %p109
        %p387 = pneg %p133
        %p388 = pneg %p130
        %p389 = pneg %p154
        %p390 = pneg %p151
        %p391 = pneg %p175
        %p392 = pneg %p172
        %p393 = pneg %p196
        %p394 = pneg %p193
        %p395 = pneg %p217
        %p396 = pneg %p214
        %p397 = pneg %p243
        %p398 = pneg %p240
        %s399 = sand.u32 %s230, 1
        %s400 = scalar_lea.sflag [#allocation4], %s399
        %s401 = sand.u32 %s230, 1
        %s402 = smul.addr %s401, 8
        %s403 = scalar_lea.vmem [#allocation11], %s402
        %v405 = vld [vmem:[%s353] sm:$0xff]
        %v406 = vmul.f32 %v405, %v405
        %vm407 = vcmask 261120
        %v408 = vsel %vm407, %v406, 0.0
        %409 = vadd.xlane.f32.xlu0 %v408
        %v410 = vpop.xlane.xlu0 %409
        %v411 = vrcp.pop 32.0
        %v412 = vmul.f32 %v410, %v411
        %v413 = vadd.f32 %v412, 1.1920929e-07
        %v414 = vrsqrt.pop %v413
        %v415 = vmul.f32 %v405, %v414
        %v416 = vld [vmem:[%s2] sm:$0x1]
        %v418 = vlaneseq
        %v419 = vshrl.u32 %v418, 7
        %v420 = vsub.s32 0, %v419
        %v421 = vrot.slane %v416, %v420
        %v423 = vmul.f32 %v415, %v421
        %v424 = vpack.c.bf16 %v423, %v423
        %v425 = vld [vmem:[#allocation7] sm:$0xf]
        %v426 = vld [vmem:[#allocation7 + $0x4] sm:$0xf]
        %v427 = vld [vmem:[#allocation7 + $0x8] sm:$0xf]
        %v428 = vld [vmem:[#allocation7 + $0xc] sm:$0xf]
        %v433 = vunpack.c.l.b16 %v425
        %v434 = vunpack.c.l.b16 %v426
        %v435 = vunpack.c.l.b16 %v427
        %v436 = vunpack.c.l.b16 %v428
        %v437 = vpack.c.b16 %v434, %v433
        %v438 = vpack.c.b16 %v436, %v435
        %v442 = vsel %vm407, %v424, 0
        %444 = vmatprep.subr.bf16.mxu0 0
        %445 = vmatpush1.bf16.msra.mxu0 %v437
        %446 = vmatprep.subr.bf16.mxu0 0
        %447 = vmatpush1.bf16.msra.mxu0 %v438
        %448 = vmatprep.subr.bf16.mxu0 0
        %449 = vmatpush1.bf16.msra.mxu0 0
        %450 = vmatprep.subr.bf16.mxu0 0
        %451 = vmatpush1.bf16.msra.mxu0 0
        %452 = vmatprep.subr.bf16.mxu0 0
        %453 = vmatpush1.bf16.msra.mxu0 0
        %454 = vmatprep.subr.bf16.mxu0 0
        %455 = vmatpush1.bf16.msra.mxu0 0
        %456 = vmatprep.subr.bf16.mxu0 0
        %457 = vmatpush1.bf16.msra.mxu0 0
        %458 = vmatprep.subr.bf16.mxu0 0
        %459 = vmatpush1.bf16.msra.mxu0 0
        %460 = vmatprep.subr.bf16.mxu0 0
        %461 = vmatpush1.bf16.msra.mxu0 0
        %462 = vmatprep.subr.bf16.mxu0 0
        %463 = vmatpush1.bf16.msra.mxu0 0
        %464 = vmatprep.subr.bf16.mxu0 0
        %465 = vmatpush1.bf16.msra.mxu0 0
        %466 = vmatprep.subr.bf16.mxu0 0
        %467 = vmatpush1.bf16.msra.mxu0 0
        %468 = vmatprep.subr.bf16.mxu0 0
        %469 = vmatpush1.bf16.msra.mxu0 0
        %470 = vmatprep.subr.bf16.mxu0 0
        %471 = vmatpush1.bf16.msra.mxu0 0
        %472 = vmatprep.subr.bf16.mxu0 0
        %473 = vmatpush1.bf16.msra.mxu0 0
        %474 = vmatprep.subr.bf16.mxu0 0
        %475 = vmatpush1.bf16.msra.mxu0 0
        %476 = vmatprep.mubr.bf16.mxu0 0
        %477 = vmatmul.mubr.bf16.gmra.mrb[0].mxu0 %v442
        %v478 = vpop.f32.mrb[0].mxu0
        %v479 = vadd.f32 0.0, %v478
        %v480 = vpop.f32.mrb[0].mxu0
        %v481 = vpop.f32.mrb[0].mxu0
        %v482 = vpop.f32.mrb[0].mxu0
        %483 = vdwg.mxu0
        %v484 = vpack.c.bf16 %v479, %v479
        %486 = vrot.lane.b32.xlu0 %v484, 120
        %v487 = vpop.permute.xlu0 %486
        %488 = vrot.lane.b32.xlu0 %v484, 112
        %v489 = vpop.permute.xlu0 %488
        %490 = vrot.lane.b32.xlu0 %v484, 104
        %v491 = vpop.permute.xlu0 %490
        %v492 = vld [vmem:[#allocation5] sm:$0xff]
        %493 = vrot.lane.b32.xlu0 %v484, 96
        %v494 = vpop.permute.xlu0 %493
        %vm495 = vcmask 64512
        %v497 = vsel %vm495, %v484, 0
        %v500 = vsel %vm495, %v494, 0
        %502 = vmatprep.subr.bf16.mxu0 0
        %503 = vmatpush1.bf16.xpose.msra.mxu0 %v500
        %504 = vmatprep.subr.bf16.mxu0 0
        %505 = vmatpush1.bf16.xpose.msra.mxu0 0
        %506 = vmatprep.subr.bf16.mxu0 0
        %507 = vmatpush1.bf16.xpose.msra.mxu0 0
        %508 = vmatprep.subr.bf16.mxu0 0
        %509 = vmatpush1.bf16.xpose.msra.mxu0 0
        %510 = vmatprep.subr.bf16.mxu0 0
        %511 = vmatpush1.bf16.xpose.msra.mxu0 0
        %512 = vmatprep.subr.bf16.mxu0 0
        %513 = vmatpush1.bf16.xpose.msra.mxu0 0
        %514 = vmatprep.subr.bf16.mxu0 0
        %515 = vmatpush1.bf16.xpose.msra.mxu0 0
        %516 = vmatprep.subr.bf16.mxu0 0
        %517 = vmatpush1.bf16.xpose.msra.mxu0 0
        %518 = vmatprep.subr.bf16.mxu0 0
        %519 = vmatpush1.bf16.xpose.msra.mxu0 0
        %520 = vmatprep.subr.bf16.mxu0 0
        %521 = vmatpush1.bf16.xpose.msra.mxu0 0
        %522 = vmatprep.subr.bf16.mxu0 0
        %523 = vmatpush1.bf16.xpose.msra.mxu0 0
        %524 = vmatprep.subr.bf16.mxu0 0
        %525 = vmatpush1.bf16.xpose.msra.mxu0 0
        %526 = vmatprep.subr.bf16.mxu0 0
        %527 = vmatpush1.bf16.xpose.msra.mxu0 0
        %528 = vmatprep.subr.bf16.mxu0 0
        %529 = vmatpush1.bf16.xpose.msra.mxu0 0
        %530 = vmatprep.subr.bf16.mxu0 0
        %531 = vmatpush1.bf16.xpose.msra.mxu0 0
        %532 = vmatprep.subr.bf16.mxu0 0
        %533 = vmatpush1.bf16.xpose.msra.mxu0 0
        %534 = vmatprep.mubr.bf16.mxu0 0
        %535 = vmatmul.mubr.bf16.gmra.mrb[0].mxu0 %v497
        %v536 = vpop.f32.mrb[0].mxu0
        %v537 = vadd.f32 %v492, %v536
        %v538 = vpop.f32.mrb[0].mxu0
        %v539 = vpop.f32.mrb[0].mxu0
        %v540 = vpop.f32.mrb[0].mxu0
        %541 = vdwg.mxu0
        %542 = vrot.lane.b32.xlu0 %v487, 96
        %v543 = vpop.permute.xlu0 %542
        %v545 = vsel %vm495, %v487, 0
        %v548 = vsel %vm495, %v543, 0
        %550 = vmatprep.subr.bf16.mxu0 0
        %551 = vmatpush1.bf16.xpose.msra.mxu0 %v548
        %552 = vmatprep.subr.bf16.mxu0 0
        %553 = vmatpush1.bf16.xpose.msra.mxu0 0
        %554 = vmatprep.subr.bf16.mxu0 0
        %555 = vmatpush1.bf16.xpose.msra.mxu0 0
        %556 = vmatprep.subr.bf16.mxu0 0
        %557 = vmatpush1.bf16.xpose.msra.mxu0 0
        %558 = vmatprep.subr.bf16.mxu0 0
        %559 = vmatpush1.bf16.xpose.msra.mxu0 0
        %560 = vmatprep.subr.bf16.mxu0 0
        %561 = vmatpush1.bf16.xpose.msra.mxu0 0
        %562 = vmatprep.subr.bf16.mxu0 0
        %563 = vmatpush1.bf16.xpose.msra.mxu0 0
        %564 = vmatprep.subr.bf16.mxu0 0
        %565 = vmatpush1.bf16.xpose.msra.mxu0 0
        %566 = vmatprep.subr.bf16.mxu0 0
        %567 = vmatpush1.bf16.xpose.msra.mxu0 0
        %568 = vmatprep.subr.bf16.mxu0 0
        %569 = vmatpush1.bf16.xpose.msra.mxu0 0
        %570 = vmatprep.subr.bf16.mxu0 0
        %571 = vmatpush1.bf16.xpose.msra.mxu0 0
        %572 = vmatprep.subr.bf16.mxu0 0
        %573 = vmatpush1.bf16.xpose.msra.mxu0 0
        %574 = vmatprep.subr.bf16.mxu0 0
        %575 = vmatpush1.bf16.xpose.msra.mxu0 0
        %576 = vmatprep.subr.bf16.mxu0 0
        %577 = vmatpush1.bf16.xpose.msra.mxu0 0
        %578 = vmatprep.subr.bf16.mxu0 0
        %579 = vmatpush1.bf16.xpose.msra.mxu0 0
        %580 = vmatprep.subr.bf16.mxu0 0
        %581 = vmatpush1.bf16.xpose.msra.mxu0 0
        %582 = vmatprep.mubr.bf16.mxu0 0
        %583 = vmatmul.mubr.bf16.gmra.mrb[0].mxu0 %v545
        %v584 = vpop.f32.mrb[0].mxu0
        %v585 = vadd.f32 %v492, %v584
        %v586 = vpop.f32.mrb[0].mxu0
        %v587 = vpop.f32.mrb[0].mxu0
        %v588 = vpop.f32.mrb[0].mxu0
        %589 = vdwg.mxu0
        %590 = vrot.lane.b32.xlu0 %v489, 96
        %v591 = vpop.permute.xlu0 %590
        %v593 = vsel %vm495, %v489, 0
        %v596 = vsel %vm495, %v591, 0
        %598 = vmatprep.subr.bf16.mxu0 0
        %599 = vmatpush1.bf16.xpose.msra.mxu0 %v596
        %600 = vmatprep.subr.bf16.mxu0 0
        %601 = vmatpush1.bf16.xpose.msra.mxu0 0
        %602 = vmatprep.subr.bf16.mxu0 0
        %603 = vmatpush1.bf16.xpose.msra.mxu0 0
        %604 = vmatprep.subr.bf16.mxu0 0
        %605 = vmatpush1.bf16.xpose.msra.mxu0 0
        %606 = vmatprep.subr.bf16.mxu0 0
        %607 = vmatpush1.bf16.xpose.msra.mxu0 0
        %608 = vmatprep.subr.bf16.mxu0 0
        %609 = vmatpush1.bf16.xpose.msra.mxu0 0
        %610 = vmatprep.subr.bf16.mxu0 0
        %611 = vmatpush1.bf16.xpose.msra.mxu0 0
        %612 = vmatprep.subr.bf16.mxu0 0
        %613 = vmatpush1.bf16.xpose.msra.mxu0 0
        %614 = vmatprep.subr.bf16.mxu0 0
        %615 = vmatpush1.bf16.xpose.msra.mxu0 0
        %616 = vmatprep.subr.bf16.mxu0 0
        %617 = vmatpush1.bf16.xpose.msra.mxu0 0
        %618 = vmatprep.subr.bf16.mxu0 0
        %619 = vmatpush1.bf16.xpose.msra.mxu0 0
        %620 = vmatprep.subr.bf16.mxu0 0
        %621 = vmatpush1.bf16.xpose.msra.mxu0 0
        %622 = vmatprep.subr.bf16.mxu0 0
        %623 = vmatpush1.bf16.xpose.msra.mxu0 0
        %624 = vmatprep.subr.bf16.mxu0 0
        %625 = vmatpush1.bf16.xpose.msra.mxu0 0
        %626 = vmatprep.subr.bf16.mxu0 0
        %627 = vmatpush1.bf16.xpose.msra.mxu0 0
        %628 = vmatprep.subr.bf16.mxu0 0
        %629 = vmatpush1.bf16.xpose.msra.mxu0 0
        %630 = vmatprep.mubr.bf16.mxu0 0
        %631 = vmatmul.mubr.bf16.gmra.mrb[0].mxu0 %v593
        %v632 = vpop.f32.mrb[0].mxu0
        %v633 = vadd.f32 %v492, %v632
        %v634 = vpop.f32.mrb[0].mxu0
        %v635 = vpop.f32.mrb[0].mxu0
        %v636 = vpop.f32.mrb[0].mxu0
        %637 = vdwg.mxu0
        %638 = vrot.lane.b32.xlu0 %v491, 96
        %v639 = vpop.permute.xlu0 %638
        %v641 = vsel %vm495, %v491, 0
        %v644 = vsel %vm495, %v639, 0
        %646 = vmatprep.subr.bf16.mxu0 0
        %647 = vmatpush1.bf16.xpose.msra.mxu0 %v644
        %648 = vmatprep.subr.bf16.mxu0 0
        %649 = vmatpush1.bf16.xpose.msra.mxu0 0
        %650 = vmatprep.subr.bf16.mxu0 0
        %651 = vmatpush1.bf16.xpose.msra.mxu0 0
        %652 = vmatprep.subr.bf16.mxu0 0
        %653 = vmatpush1.bf16.xpose.msra.mxu0 0
        %654 = vmatprep.subr.bf16.mxu0 0
        %655 = vmatpush1.bf16.xpose.msra.mxu0 0
        %656 = vmatprep.subr.bf16.mxu0 0
        %657 = vmatpush1.bf16.xpose.msra.mxu0 0
        %658 = vmatprep.subr.bf16.mxu0 0
        %659 = vmatpush1.bf16.xpose.msra.mxu0 0
        %660 = vmatprep.subr.bf16.mxu0 0
        %661 = vmatpush1.bf16.xpose.msra.mxu0 0
        %662 = vmatprep.subr.bf16.mxu0 0
        %663 = vmatpush1.bf16.xpose.msra.mxu0 0
        %664 = vmatprep.subr.bf16.mxu0 0
        %665 = vmatpush1.bf16.xpose.msra.mxu0 0
        %666 = vmatprep.subr.bf16.mxu0 0
        %667 = vmatpush1.bf16.xpose.msra.mxu0 0
        %668 = vmatprep.subr.bf16.mxu0 0
        %669 = vmatpush1.bf16.xpose.msra.mxu0 0
        %670 = vmatprep.subr.bf16.mxu0 0
        %671 = vmatpush1.bf16.xpose.msra.mxu0 0
        %672 = vmatprep.subr.bf16.mxu0 0
        %673 = vmatpush1.bf16.xpose.msra.mxu0 0
        %674 = vmatprep.subr.bf16.mxu0 0
        %675 = vmatpush1.bf16.xpose.msra.mxu0 0
        %676 = vmatprep.subr.bf16.mxu0 0
        %677 = vmatpush1.bf16.xpose.msra.mxu0 0
        %678 = vmatprep.mubr.bf16.mxu0 0
        %679 = vmatmul.mubr.bf16.gmra.mrb[0].mxu0 %v641
        %v680 = vpop.f32.mrb[0].mxu0
        %v681 = vadd.f32 %v492, %v680
        %v682 = vpop.f32.mrb[0].mxu0
        %v683 = vpop.f32.mrb[0].mxu0
        %v684 = vpop.f32.mrb[0].mxu0
        %685 = vdwg.mxu0
        %v686 = vsel %vm495, %v537, -inf
        %687 = vmax.xlane.f32.xlu0 %v686
        %v688 = vpop.xlane.xlu0 %687
        %v689 = vsel %vm495, %v585, -inf
        %690 = vmax.xlane.f32.xlu0 %v689
        %v691 = vpop.xlane.xlu0 %690
        %v692 = vsel %vm495, %v633, -inf
        %693 = vmax.xlane.f32.xlu0 %v692
        %v694 = vpop.xlane.xlu0 %693
        %v695 = vsel %vm495, %v681, -inf
        %696 = vmax.xlane.f32.xlu0 %v695
        %v697 = vpop.xlane.xlu0 %696
        %v698 = vsub.f32 %v537, %v688
        %v699 = vsub.f32 %v585, %v691
        %v700 = vsub.f32 %v633, %v694
        %v701 = vsub.f32 %v681, %v697
        %v702 = vmul.f32 %v698, 1.442695
        %v703 = vpow.pop %v702
        %v704 = vmul.f32 %v699, 1.442695
        %v705 = vpow.pop %v704
        %v706 = vmul.f32 %v700, 1.442695
        %v707 = vpow.pop %v706
        %v708 = vmul.f32 %v701, 1.442695
        %v709 = vpow.pop %v708
        %v710 = vsel %vm495, %v703, 0.0
        %711 = vadd.xlane.f32.xlu0 %v710
        %v712 = vpop.xlane.xlu0 %711
        %v713 = vsel %vm495, %v705, 0.0
        %714 = vadd.xlane.f32.xlu0 %v713
        %v715 = vpop.xlane.xlu0 %714
        %v716 = vsel %vm495, %v707, 0.0
        %717 = vadd.xlane.f32.xlu0 %v716
        %v718 = vpop.xlane.xlu0 %717
        %v719 = vsel %vm495, %v709, 0.0
        %720 = vadd.xlane.f32.xlu0 %v719
        %v721 = vpop.xlane.xlu0 %720
        %v722 = vrcp.pop %v712
        %v723 = vrcp.pop %v715
        %v724 = vrcp.pop %v718
        %v725 = vrcp.pop %v721
        %v726 = vmul.f32 %v703, %v722
        %v727 = vmul.f32 %v705, %v723
        %v728 = vmul.f32 %v707, %v724
        %v729 = vmul.f32 %v709, %v725
        %v730 = vpack.c.bf16 %v726, %v726
        %v731 = vpack.c.bf16 %v727, %v727
        %v732 = vpack.c.bf16 %v728, %v728
        %v733 = vpack.c.bf16 %v729, %v729
        %734 = vrot.lane.b32.xlu0 %v484, 64
        %v735 = vpop.permute.xlu0 %734
        %v737 = vsel %vm495, %v730, 0
        %vm739 = vcmask 1043456
        %v741 = vsel %vm739, %v735, 0
        %743 = vmatprep.subr.bf16.mxu0 0
        %744 = vmatpush1.bf16.msra.mxu0 %v741
        %745 = vmatprep.subr.bf16.mxu0 0
        %746 = vmatpush1.bf16.msra.mxu0 0
        %747 = vmatprep.subr.bf16.mxu0 0
        %748 = vmatpush1.bf16.msra.mxu0 0
        %749 = vmatprep.subr.bf16.mxu0 0
        %750 = vmatpush1.bf16.msra.mxu0 0
        %751 = vmatprep.subr.bf16.mxu0 0
        %752 = vmatpush1.bf16.msra.mxu0 0
        %753 = vmatprep.subr.bf16.mxu0 0
        %754 = vmatpush1.bf16.msra.mxu0 0
        %755 = vmatprep.subr.bf16.mxu0 0
        %756 = vmatpush1.bf16.msra.mxu0 0
        %757 = vmatprep.subr.bf16.mxu0 0
        %758 = vmatpush1.bf16.msra.mxu0 0
        %759 = vmatprep.subr.bf16.mxu0 0
        %760 = vmatpush1.bf16.msra.mxu0 0
        %761 = vmatprep.subr.bf16.mxu0 0
        %762 = vmatpush1.bf16.msra.mxu0 0
        %763 = vmatprep.subr.bf16.mxu0 0
        %764 = vmatpush1.bf16.msra.mxu0 0
        %765 = vmatprep.subr.bf16.mxu0 0
        %766 = vmatpush1.bf16.msra.mxu0 0
        %767 = vmatprep.subr.bf16.mxu0 0
        %768 = vmatpush1.bf16.msra.mxu0 0
        %769 = vmatprep.subr.bf16.mxu0 0
        %770 = vmatpush1.bf16.msra.mxu0 0
        %771 = vmatprep.subr.bf16.mxu0 0
        %772 = vmatpush1.bf16.msra.mxu0 0
        %773 = vmatprep.subr.bf16.mxu0 0
        %774 = vmatpush1.bf16.msra.mxu0 0
        %775 = vmatprep.mubr.bf16.mxu0 0
        %776 = vmatmul.mubr.bf16.gmra.mrb[0].mxu0 %v737
        %v777 = vpop.f32.mrb[0].mxu0
        %v778 = vadd.f32 0.0, %v777
        %v779 = vpop.f32.mrb[0].mxu0
        %v780 = vpop.f32.mrb[0].mxu0
        %v781 = vpop.f32.mrb[0].mxu0
        %782 = vdwg.mxu0
        %783 = vrot.lane.b32.xlu0 %v487, 64
        %v784 = vpop.permute.xlu0 %783
        %v786 = vsel %vm495, %v731, 0
        %v789 = vsel %vm739, %v784, 0
        %791 = vmatprep.subr.bf16.mxu0 0
        %792 = vmatpush1.bf16.msra.mxu0 %v789
        %793 = vmatprep.subr.bf16.mxu0 0
        %794 = vmatpush1.bf16.msra.mxu0 0
        %795 = vmatprep.subr.bf16.mxu0 0
        %796 = vmatpush1.bf16.msra.mxu0 0
        %797 = vmatprep.subr.bf16.mxu0 0
        %798 = vmatpush1.bf16.msra.mxu0 0
        %799 = vmatprep.subr.bf16.mxu0 0
        %800 = vmatpush1.bf16.msra.mxu0 0
        %801 = vmatprep.subr.bf16.mxu0 0
        %802 = vmatpush1.bf16.msra.mxu0 0
        %803 = vmatprep.subr.bf16.mxu0 0
        %804 = vmatpush1.bf16.msra.mxu0 0
        %805 = vmatprep.subr.bf16.mxu0 0
        %806 = vmatpush1.bf16.msra.mxu0 0
        %807 = vmatprep.subr.bf16.mxu0 0
        %808 = vmatpush1.bf16.msra.mxu0 0
        %809 = vmatprep.subr.bf16.mxu0 0
        %810 = vmatpush1.bf16.msra.mxu0 0
        %811 = vmatprep.subr.bf16.mxu0 0
        %812 = vmatpush1.bf16.msra.mxu0 0
        %813 = vmatprep.subr.bf16.mxu0 0
        %814 = vmatpush1.bf16.msra.mxu0 0
        %815 = vmatprep.subr.bf16.mxu0 0
        %816 = vmatpush1.bf16.msra.mxu0 0
        %817 = vmatprep.subr.bf16.mxu0 0
        %818 = vmatpush1.bf16.msra.mxu0 0
        %819 = vmatprep.subr.bf16.mxu0 0
        %820 = vmatpush1.bf16.msra.mxu0 0
        %821 = vmatprep.subr.bf16.mxu0 0
        %822 = vmatpush1.bf16.msra.mxu0 0
        %823 = vmatprep.mubr.bf16.mxu0 0
        %824 = vmatmul.mubr.bf16.gmra.mrb[0].mxu0 %v786
        %v825 = vpop.f32.mrb[0].mxu0
        %v826 = vadd.f32 0.0, %v825
        %v827 = vpop.f32.mrb[0].mxu0
        %v828 = vpop.f32.mrb[0].mxu0
        %v829 = vpop.f32.mrb[0].mxu0
        %830 = vdwg.mxu0
        %831 = vrot.lane.b32.xlu0 %v489, 64
        %v832 = vpop.permute.xlu0 %831
        %v834 = vsel %vm495, %v732, 0
        %v837 = vsel %vm739, %v832, 0
        %839 = vmatprep.subr.bf16.mxu0 0
        %840 = vmatpush1.bf16.msra.mxu0 %v837
        %841 = vmatprep.subr.bf16.mxu0 0
        %842 = vmatpush1.bf16.msra.mxu0 0
        %843 = vmatprep.subr.bf16.mxu0 0
        %844 = vmatpush1.bf16.msra.mxu0 0
        %845 = vmatprep.subr.bf16.mxu0 0
        %846 = vmatpush1.bf16.msra.mxu0 0
        %847 = vmatprep.subr.bf16.mxu0 0
        %848 = vmatpush1.bf16.msra.mxu0 0
        %849 = vmatprep.subr.bf16.mxu0 0
        %850 = vmatpush1.bf16.msra.mxu0 0
        %851 = vmatprep.subr.bf16.mxu0 0
        %852 = vmatpush1.bf16.msra.mxu0 0
        %853 = vmatprep.subr.bf16.mxu0 0
        %854 = vmatpush1.bf16.msra.mxu0 0
        %855 = vmatprep.subr.bf16.mxu0 0
        %856 = vmatpush1.bf16.msra.mxu0 0
        %857 = vmatprep.subr.bf16.mxu0 0
        %858 = vmatpush1.bf16.msra.mxu0 0
        %859 = vmatprep.subr.bf16.mxu0 0
        %860 = vmatpush1.bf16.msra.mxu0 0
        %861 = vmatprep.subr.bf16.mxu0 0
        %862 = vmatpush1.bf16.msra.mxu0 0
        %863 = vmatprep.subr.bf16.mxu0 0
        %864 = vmatpush1.bf16.msra.mxu0 0
        %865 = vmatprep.subr.bf16.mxu0 0
        %866 = vmatpush1.bf16.msra.mxu0 0
        %867 = vmatprep.subr.bf16.mxu0 0
        %868 = vmatpush1.bf16.msra.mxu0 0
        %869 = vmatprep.subr.bf16.mxu0 0
        %870 = vmatpush1.bf16.msra.mxu0 0
        %871 = vmatprep.mubr.bf16.mxu0 0
        %872 = vmatmul.mubr.bf16.gmra.mrb[0].mxu0 %v834
        %v873 = vpop.f32.mrb[0].mxu0
        %v874 = vadd.f32 0.0, %v873
        %v875 = vpop.f32.mrb[0].mxu0
        %v876 = vpop.f32.mrb[0].mxu0
        %v877 = vpop.f32.mrb[0].mxu0
        %878 = vdwg.mxu0
        %879 = vrot.lane.b32.xlu0 %v491, 64
        %v880 = vpop.permute.xlu0 %879
        %v882 = vsel %vm495, %v733, 0
        %v885 = vsel %vm739, %v880, 0
        %887 = vmatprep.subr.bf16.mxu0 0
        %888 = vmatpush1.bf16.msra.mxu0 %v885
        %889 = vmatprep.subr.bf16.mxu0 0
        %890 = vmatpush1.bf16.msra.mxu0 0
        %891 = vmatprep.subr.bf16.mxu0 0
        %892 = vmatpush1.bf16.msra.mxu0 0
        %893 = vmatprep.subr.bf16.mxu0 0
        %894 = vmatpush1.bf16.msra.mxu0 0
        %895 = vmatprep.subr.bf16.mxu0 0
        %896 = vmatpush1.bf16.msra.mxu0 0
        %897 = vmatprep.subr.bf16.mxu0 0
        %898 = vmatpush1.bf16.msra.mxu0 0
        %899 = vmatprep.subr.bf16.mxu0 0
        %900 = vmatpush1.bf16.msra.mxu0 0
        %901 = vmatprep.subr.bf16.mxu0 0
        %902 = vmatpush1.bf16.msra.mxu0 0
        %903 = vmatprep.subr.bf16.mxu0 0
        %904 = vmatpush1.bf16.msra.mxu0 0
        %905 = vmatprep.subr.bf16.mxu0 0
        %906 = vmatpush1.bf16.msra.mxu0 0
        %907 = vmatprep.subr.bf16.mxu0 0
        %908 = vmatpush1.bf16.msra.mxu0 0
        %909 = vmatprep.subr.bf16.mxu0 0
        %910 = vmatpush1.bf16.msra.mxu0 0
        %911 = vmatprep.subr.bf16.mxu0 0
        %912 = vmatpush1.bf16.msra.mxu0 0
        %913 = vmatprep.subr.bf16.mxu0 0
        %914 = vmatpush1.bf16.msra.mxu0 0
        %915 = vmatprep.subr.bf16.mxu0 0
        %916 = vmatpush1.bf16.msra.mxu0 0
        %917 = vmatprep.subr.bf16.mxu0 0
        %918 = vmatpush1.bf16.msra.mxu0 0
        %919 = vmatprep.mubr.bf16.mxu0 0
        %920 = vmatmul.mubr.bf16.gmra.mrb[0].mxu0 %v882
        %v921 = vpop.f32.mrb[0].mxu0
        %v922 = vadd.f32 0.0, %v921
        %v923 = vpop.f32.mrb[0].mxu0
        %v924 = vpop.f32.mrb[0].mxu0
        %v925 = vpop.f32.mrb[0].mxu0
        %926 = vdwg.mxu0
        %928 = vrot.lane.b32.xlu0 %v826, 8
        %v929 = vpop.permute.xlu0 %928
        %932 = vrot.lane.b32.xlu0 %v874, 16
        %v933 = vpop.permute.xlu0 %932
        %936 = vrot.lane.b32.xlu0 %v922, 24
        %v937 = vpop.permute.xlu0 %936
        %v939 = vsel %vm495, %v778, %v929
        %vm940 = vcmask 130048
        %v941 = vsel %vm940, %v939, %v933
        %vm942 = vcmask 195584
        %v943 = vsel %vm942, %v941, %v937
        %v944 = vpack.c.bf16 %v943, %v943
        %v945 = vld [vmem:[#allocation8] sm:$0xf]
        %v946 = vld [vmem:[#allocation8 + $0x4] sm:$0xf]
        %v947 = vld [vmem:[#allocation8 + $0x8] sm:$0xf]
        %v948 = vld [vmem:[#allocation8 + $0xc] sm:$0xf]
        %v949 = vld [vmem:[%s5] sm:$0x1]
        %v951 = vlaneseq
        %v952 = vshrl.u32 %v951, 7
        %v953 = vsub.s32 0, %v952
        %v954 = vrot.slane %v949, %v953
        %v960 = vunpack.c.l.b16 %v945
        %v961 = vunpack.c.l.b16 %v946
        %v962 = vunpack.c.l.b16 %v947
        %v963 = vunpack.c.l.b16 %v948
        %v964 = vpack.c.b16 %v961, %v960
        %v965 = vpack.c.b16 %v963, %v962
        %v969 = vsel %vm407, %v944, 0
        %971 = vmatprep.subr.bf16.mxu0 0
        %972 = vmatpush1.bf16.msra.mxu0 %v964
        %973 = vmatprep.subr.bf16.mxu0 0
        %974 = vmatpush1.bf16.msra.mxu0 %v965
        %975 = vmatprep.subr.bf16.mxu0 0
        %976 = vmatpush1.bf16.msra.mxu0 0
        %977 = vmatprep.subr.bf16.mxu0 0
        %978 = vmatpush1.bf16.msra.mxu0 0
        %979 = vmatprep.subr.bf16.mxu0 0
        %980 = vmatpush1.bf16.msra.mxu0 0
        %981 = vmatprep.subr.bf16.mxu0 0
        %982 = vmatpush1.bf16.msra.mxu0 0
        %983 = vmatprep.subr.bf16.mxu0 0
        %984 = vmatpush1.bf16.msra.mxu0 0
        %985 = vmatprep.subr.bf16.mxu0 0
        %986 = vmatpush1.bf16.msra.mxu0 0
        %987 = vmatprep.subr.bf16.mxu0 0
        %988 = vmatpush1.bf16.msra.mxu0 0
        %989 = vmatprep.subr.bf16.mxu0 0
        %990 = vmatpush1.bf16.msra.mxu0 0
        %991 = vmatprep.subr.bf16.mxu0 0
        %992 = vmatpush1.bf16.msra.mxu0 0
        %993 = vmatprep.subr.bf16.mxu0 0
        %994 = vmatpush1.bf16.msra.mxu0 0
        %995 = vmatprep.subr.bf16.mxu0 0
        %996 = vmatpush1.bf16.msra.mxu0 0
        %997 = vmatprep.subr.bf16.mxu0 0
        %998 = vmatpush1.bf16.msra.mxu0 0
        %999 = vmatprep.subr.bf16.mxu0 0
        %1000 = vmatpush1.bf16.msra.mxu0 0
        %1001 = vmatprep.subr.bf16.mxu0 0
        %1002 = vmatpush1.bf16.msra.mxu0 0
        %1003 = vmatprep.mubr.bf16.mxu0 0
        %1004 = vmatmul.mubr.bf16.gmra.mrb[0].mxu0 %v969
        %v1005 = vpop.f32.mrb[0].mxu0
        %v1006 = vadd.f32 %v954, %v1005
        %v1007 = vpop.f32.mrb[0].mxu0
        %v1008 = vpop.f32.mrb[0].mxu0
        %v1009 = vpop.f32.mrb[0].mxu0
        %1010 = vdwg.mxu0
        %v1011 = vadd.f32 %v405, %v1006
        %v1012 = vmul.f32 %v1011, %v1011
        %v1013 = vsel %vm407, %v1012, 0.0
        %1014 = vadd.xlane.f32.xlu0 %v1013
        %v1015 = vpop.xlane.xlu0 %1014
        %v1016 = vmul.f32 %v1015, %v411
        %v1017 = vadd.f32 %v1016, 1.1920929e-07
        %v1018 = vrsqrt.pop %v1017
        %v1019 = vmul.f32 %v1011, %v1018
        %v1020 = vld [vmem:[%s6] sm:$0x1]
        %v1022 = vlaneseq
        %v1023 = vshrl.u32 %v1022, 7
        %v1024 = vsub.s32 0, %v1023
        %v1025 = vrot.slane %v1020, %v1024
        %v1027 = vmul.f32 %v1019, %v1025
        %v1028 = vpack.c.bf16 %v1027, %v1027
        %v1029 = vld [vmem:[%s7] sm:$0xf]
        %v1030 = vld [vmem:[%s7 + $0x4] sm:$0xf]
        %v1031 = vld [vmem:[%s7 + $0x8] sm:$0xf]
        %v1032 = vld [vmem:[%s7 + $0xc] sm:$0xf]
        %v1037 = vunpack.c.l.b16 %v1029
        %v1038 = vunpack.c.l.b16 %v1030
        %v1039 = vunpack.c.l.b16 %v1031
        %v1040 = vunpack.c.l.b16 %v1032
        %v1041 = vpack.c.b16 %v1038, %v1037
        %v1042 = vpack.c.b16 %v1040, %v1039
        %v1046 = vsel %vm407, %v1028, 0
        %1048 = vmatprep.subr.bf16.mxu0 0
        %1049 = vmatpush1.bf16.msra.mxu0 %v1041
        %1050 = vmatprep.subr.bf16.mxu0 0
        %1051 = vmatpush1.bf16.msra.mxu0 %v1042
        %1052 = vmatprep.subr.bf16.mxu0 0
        %1053 = vmatpush1.bf16.msra.mxu0 0
        %1054 = vmatprep.subr.bf16.mxu0 0
        %1055 = vmatpush1.bf16.msra.mxu0 0
        %1056 = vmatprep.subr.bf16.mxu0 0
        %1057 = vmatpush1.bf16.msra.mxu0 0
        %1058 = vmatprep.subr.bf16.mxu0 0
        %1059 = vmatpush1.bf16.msra.mxu0 0
        %1060 = vmatprep.subr.bf16.mxu0 0
        %1061 = vmatpush1.bf16.msra.mxu0 0
        %1062 = vmatprep.subr.bf16.mxu0 0
        %1063 = vmatpush1.bf16.msra.mxu0 0
        %1064 = vmatprep.subr.bf16.mxu0 0
        %1065 = vmatpush1.bf16.msra.mxu0 0
        %1066 = vmatprep.subr.bf16.mxu0 0
        %1067 = vmatpush1.bf16.msra.mxu0 0
        %1068 = vmatprep.subr.bf16.mxu0 0
        %1069 = vmatpush1.bf16.msra.mxu0 0
        %1070 = vmatprep.subr.bf16.mxu0 0
        %1071 = vmatpush1.bf16.msra.mxu0 0
        %1072 = vmatprep.subr.bf16.mxu0 0
        %1073 = vmatpush1.bf16.msra.mxu0 0
        %1074 = vmatprep.subr.bf16.mxu0 0
        %1075 = vmatpush1.bf16.msra.mxu0 0
        %1076 = vmatprep.subr.bf16.mxu0 0
        %1077 = vmatpush1.bf16.msra.mxu0 0
        %1078 = vmatprep.subr.bf16.mxu0 0
        %1079 = vmatpush1.bf16.msra.mxu0 0
        %1080 = vmatprep.mubr.bf16.mxu0 0
        %1081 = vmatmul.mubr.bf16.gmra.mrb[0].mxu0 %v1046
        %v1082 = vpop.f32.mrb[0].mxu0
        %v1083 = vadd.f32 0.0, %v1082
        %v1084 = vpop.f32.mrb[0].mxu0
        %v1085 = vpop.f32.mrb[0].mxu0
        %v1086 = vpop.f32.mrb[0].mxu0
        %1087 = vdwg.mxu0
        %v1088 = vxor.u32 %v1083, 2147483648
        %v1089 = vmul.f32 %v1088, 1.442695
        %v1090 = vpow.pop %v1089
        %v1091 = vadd.f32 %v1090, 1.0
        %v1092 = vrcp.pop %v1091
        %v1093 = vmul.f32 1.0, %v1092
        %v1094 = vmul.f32 %v1083, %v1093
        %1096 = vrot.lane.b32.xlu0 %v1083, 96
        %v1097 = vpop.permute.xlu0 %1096
        %v1099 = vmul.f32 %v1094, %v1097
        %v1100 = vpack.c.bf16 %v1099, %v1099
        %v1101 = vld [vmem:[#allocation10] sm:$0xf]
        %v1102 = vld [vmem:[#allocation10 + $0x4] sm:$0xf]
        %v1103 = vld [vmem:[#allocation10 + $0x8] sm:$0xf]
        %v1104 = vld [vmem:[#allocation10 + $0xc] sm:$0xf]
        %v1109 = vunpack.c.l.b16 %v1101
        %v1110 = vunpack.c.l.b16 %v1102
        %v1111 = vunpack.c.l.b16 %v1103
        %v1112 = vunpack.c.l.b16 %v1104
        %v1113 = vpack.c.b16 %v1110, %v1109
        %v1114 = vpack.c.b16 %v1112, %v1111
        %v1118 = vsel %vm407, %v1100, 0
        %1120 = vmatprep.subr.bf16.mxu0 0
        %1121 = vmatpush1.bf16.msra.mxu0 %v1113
        %1122 = vmatprep.subr.bf16.mxu0 0
        %1123 = vmatpush1.bf16.msra.mxu0 %v1114
        %1124 = vmatprep.subr.bf16.mxu0 0
        %1125 = vmatpush1.bf16.msra.mxu0 0
        %1126 = vmatprep.subr.bf16.mxu0 0
        %1127 = vmatpush1.bf16.msra.mxu0 0
        %1128 = vmatprep.subr.bf16.mxu0 0
        %1129 = vmatpush1.bf16.msra.mxu0 0
        %1130 = vmatprep.subr.bf16.mxu0 0
        %1131 = vmatpush1.bf16.msra.mxu0 0
        %1132 = vmatprep.subr.bf16.mxu0 0
        %1133 = vmatpush1.bf16.msra.mxu0 0
        %1134 = vmatprep.subr.bf16.mxu0 0
        %1135 = vmatpush1.bf16.msra.mxu0 0
        %1136 = vmatprep.subr.bf16.mxu0 0
        %1137 = vmatpush1.bf16.msra.mxu0 0
        %1138 = vmatprep.subr.bf16.mxu0 0
        %1139 = vmatpush1.bf16.msra.mxu0 0
        %1140 = vmatprep.subr.bf16.mxu0 0
        %1141 = vmatpush1.bf16.msra.mxu0 0
        %1142 = vmatprep.subr.bf16.mxu0 0
        %1143 = vmatpush1.bf16.msra.mxu0 0
        %1144 = vmatprep.subr.bf16.mxu0 0
        %1145 = vmatpush1.bf16.msra.mxu0 0
        %1146 = vmatprep.subr.bf16.mxu0 0
        %1147 = vmatpush1.bf16.msra.mxu0 0
        %1148 = vmatprep.subr.bf16.mxu0 0
        %1149 = vmatpush1.bf16.msra.mxu0 0
        %1150 = vmatprep.subr.bf16.mxu0 0
        %1151 = vmatpush1.bf16.msra.mxu0 0
        %1152 = vmatprep.mubr.bf16.mxu0 0
        %1153 = vmatmul.mubr.bf16.gmra.mrb[0].mxu0 %v1118
        %v1154 = vpop.f32.mrb[0].mxu0
        %v1155 = vadd.f32 0.0, %v1154
        %v1156 = vpop.f32.mrb[0].mxu0
        %v1157 = vpop.f32.mrb[0].mxu0
        %v1158 = vpop.f32.mrb[0].mxu0
        %1159 = vdwg.mxu0
        %v1160 = vadd.f32 %v1011, %v1155
        %1161 = vst.msk [vmem:[%s403] sm:$0xff] %vm407, %v1160
        %s1162 = sand.u32 %s230, 1
        %s1163 = scalar_lea.sflag [#allocation4], %s1162
        %s1164 = sand.u32 %s230, 1
        %s1165 = smul.addr %s1164, 8
        %s1166 = scalar_lea.vmem [#allocation11], %s1165
        // Predicated region
        $region77: #{tpu_custom_call.1} parent=55 // pred_check
          %p1167 = pneg %p240
        $region78: #{tpu_custom_call.1} parent=55 // pred_check_branch
          %1169 = sbr.rel (%p1167) target = $region80
        $region79: #{tpu_custom_call.1} parent=55 // pred_region
          %s1171 = ssub.s32 128, 128
          %1172 = vsyncadd %s1163, %s1171
          %s1173 = smul.addr %s28, 128
          %s1174 = scalar_lea.hbm %s9, %s1173
          %s1176 = sshll.u32 %s1166, 4
          %s1177 = int_to_ptr.vmem [resolvable:$true] %s1176
          %1179 = dma.vmem_to_hbm [thread:$0]  %s1177, 128, %s1174, %s1163
        $region80: #{tpu_custom_call.1} parent=55 // pred_fallthru
          _
      $region56: #{tpu_custom_call.1} parent=5 // pred_fallthru
        _
      %p1180 = scmp.le.s32.totalorder 2, %s23
      // Predicated region
      $region81: #{tpu_custom_call.1} parent=5 // pred_check
        %p1181 = pneg %p1180
      $region82: #{tpu_custom_call.1} parent=5 // pred_check_branch
        %1183 = sbr.rel (%p1181) target = $region84
      $region83: #{tpu_custom_call.1} parent=5 // pred_region
        %s1184 = ssub.s32 %s23, 2
        // Predicated region
        $region85: #{tpu_custom_call.1} parent=83 // pred_check
          %p1185 = pneg %p246
        $region86: #{tpu_custom_call.1} parent=83 // pred_check_branch
          %1187 = sbr.rel (%p1185) target = $region88
        $region87: #{tpu_custom_call.1} parent=83 // pred_region
          %s1188 = sand.u32 %s231, 1
          %s1189 = scalar_lea.sflag [#allocation4], %s1188
          %s1190 = sand.u32 %s231, 1
          %s1191 = smul.addr %s1190, 8
          %s1192 = scalar_lea.vmem [#allocation11], %s1191
          %1193 = dma.done %s1189, 128
        $region88: #{tpu_custom_call.1} parent=83 // pred_fallthru
          _
      $region84: #{tpu_custom_call.1} parent=5 // pred_fallthru
        _
    $region6: #{tpu_custom_call.1} parent=1 // loop_footer
      %s27 = sadd.s32 1, %s23
    $region7: #{tpu_custom_call.1} parent=1 // loop_footer_branch
      %22 = sbr.rel target = $region3
    $region8: #{tpu_custom_call.1} parent=1 // loop_exit
      _
    %1194 = vsyncpa [#allocation3], 1
    %s1195 = scalar_lea.sflag [#allocation3], 1
    %1196 = vsyncpa %s1195, 1
    %1197 = vsyncpa [#allocation6], 1
    %1198 = vsyncpa [#allocation9], 1
    %1199 = vsyncpa [#allocation4], 1
    %s1200 = scalar_lea.sflag [#allocation4], 1
    %1201 = vsyncpa %s1200, 1

</llo_original>
